<compile_context>
chip_gen: v7x
topology: tpu7x:2x2x1
jax: 0.10.0
libtpu: 0.0.40
codegen_flags: <defaults>
</compile_context>

<pallas_src>
import functools

import jax
import jax.numpy as jnp
from jax.experimental import pallas as pl
from jax.experimental.pallas import tpu as pltpu


def mha_kernel(q_ref, k_ref, v_ref, wq_ref, wk_ref, wv_ref, wp_ref,
               scale_ref, offset_ref, o_ref, *, batch, len_q, len_k,
               n_heads, d_k, d_v, eps):
    # q_ref/k_ref/v_ref: (B*L, Dm) — batch*seq already folded onto sublanes.
    q2 = q_ref[...].astype(jnp.float32)          # (B*Lq, Dm)
    k2 = k_ref[...].astype(jnp.float32)          # (B*Lk, Dm)
    v2 = v_ref[...].astype(jnp.float32)          # (B*Lk, Dm)
    d_model = q2.shape[-1]

    # ---- fused projections: ONE wide matmul each for Q, K, V --------------
    # (1/sqrt(d_model) already folded into wq in the wrapper)
    hq = jnp.dot(q2, wq_ref[...], preferred_element_type=jnp.float32)   # (B*Lq, H*dk)
    hk = jnp.dot(k2, wk_ref[...], preferred_element_type=jnp.float32)   # (B*Lk, H*dk)
    hv = jnp.dot(v2, wv_ref[...], preferred_element_type=jnp.float32)   # (B*Lk, H*dv)

    ln_scale = scale_ref[...].astype(jnp.float32)    # (1, Dm)
    ln_offset = offset_ref[...].astype(jnp.float32)  # (1, Dm)

    # ---- per-batch attention + per-head accumulated output projection ------
    for b in range(batch):                         # static, tiny batch
        q_rows = slice(b * len_q, (b + 1) * len_q)
        k_rows = slice(b * len_k, (b + 1) * len_k)

        proj = jnp.zeros((len_q, d_model), jnp.float32)
        for h in range(n_heads):                   # static head loop
            qh = hq[q_rows, h * d_k:(h + 1) * d_k]     # (Lq, dk)
            kh = hk[k_rows, h * d_k:(h + 1) * d_k]     # (Lk, dk)
            vh = hv[k_rows, h * d_v:(h + 1) * d_v]     # (Lk, dv)

            logits = jnp.dot(qh, kh.T, preferred_element_type=jnp.float32)  # (Lq, Lk)
            m = jnp.max(logits, axis=-1, keepdims=True)
            p = jnp.exp(logits - m)                    # unnormalized probs
            denom = jnp.sum(p, axis=-1, keepdims=True)
            ctx = jnp.dot(p, vh, preferred_element_type=jnp.float32)        # (Lq, dv)
            # Deferred softmax normalization: (Lq,1) EUP reciprocal instead of
            # an (Lq,Lk) VALU divide.  approx=False keeps the 1e-5 tolerance.
            ctx = ctx * pl.reciprocal(denom, approx=False)
            # Accumulate output projection per head: equivalent to
            # concat(heads) @ wp, without the lane-axis concat.
            proj = proj + jnp.dot(ctx, wp_ref[h * d_v:(h + 1) * d_v, :],
                                  preferred_element_type=jnp.float32)
            # TODO(synk): attn dropout omitted (eval / p=0); attn_mask=None path only.

        # ---- residual + LayerNorm (torch.std: unbiased, eps added to std) --
        x = proj + q2[q_rows, :]
        mean = jnp.mean(x, axis=-1, keepdims=True)
        var = jnp.sum((x - mean) ** 2, axis=-1, keepdims=True) / jnp.float32(d_model - 1)
        inv_std = pl.reciprocal(jnp.sqrt(var) + eps, approx=False)
        out = ln_scale * (x - mean) * inv_std + ln_offset
        o_ref[q_rows, :] = out.astype(o_ref.dtype)


def multi_head_attn(q, k, v, wq, wk, wv, wp, scale, offset, *, eps=1e-9):
    """q,k,v: [B, L, d_model]; wq/wk/wv: [H, d_model, d_{k,v}];
    wp: [H, d_v, d_model]; scale/offset: [1, d_model]."""
    B, Lq, Dm = q.shape
    _, Lk, _ = k.shape
    H, _, dk = wq.shape
    _, _, dv = wv.shape

    # Fuse the per-head weights once in the wrapper (cheap XLA transpose) and
    # fold the constant 1/sqrt(d_model) attention temperature into wq:
    #   concat_h(q @ wq[h]) == q @ [Dm, H*dk],  concat(heads) @ [H*dv, Dm].
    inv_temp = jnp.float32(1.0 / (float(Dm) ** 0.5))
    wq_f = jnp.transpose(wq, (1, 0, 2)).reshape(Dm, H * dk) * inv_temp
    wk_f = jnp.transpose(wk, (1, 0, 2)).reshape(Dm, H * dk)
    wv_f = jnp.transpose(wv, (1, 0, 2)).reshape(Dm, H * dv)
    wp_f = wp.reshape(H * dv, Dm)

    # Flatten activations to 2D in the wrapper (free in HBM) so the kernel
    # never reshapes and the output is one contiguous 2D store.
    q2 = q.reshape(B * Lq, Dm)
    k2 = k.reshape(B * Lk, Dm)
    v2 = v.reshape(B * Lk, Dm)

    kernel = functools.partial(mha_kernel, batch=B, len_q=Lq, len_k=Lk,
                               n_heads=H, d_k=dk, d_v=dv, eps=eps)

    grid_spec = pltpu.PrefetchScalarGridSpec(
        num_scalar_prefetch=0,
        grid=(1,),   # single step: whole (tiny) problem resident in VMEM
        in_specs=[
            pl.BlockSpec((B * Lq, Dm), lambda i: (0, 0)),   # q
            pl.BlockSpec((B * Lk, Dm), lambda i: (0, 0)),   # k
            pl.BlockSpec((B * Lk, Dm), lambda i: (0, 0)),   # v
            pl.BlockSpec((Dm, H * dk), lambda i: (0, 0)),   # wq (fused, pre-scaled)
            pl.BlockSpec((Dm, H * dk), lambda i: (0, 0)),   # wk (fused)
            pl.BlockSpec((Dm, H * dv), lambda i: (0, 0)),   # wv (fused)
            pl.BlockSpec((H * dv, Dm), lambda i: (0, 0)),   # wp (fused)
            pl.BlockSpec((1, Dm), lambda i: (0, 0)),        # layernorm scale
            pl.BlockSpec((1, Dm), lambda i: (0, 0)),        # layernorm offset
        ],
        out_specs=pl.BlockSpec((B * Lq, Dm), lambda i: (0, 0)),
    )

    out2 = pl.pallas_call(
        kernel,
        out_shape=jax.ShapeDtypeStruct((B * Lq, Dm), q.dtype),
        grid_spec=grid_spec,
        compiler_params=pltpu.CompilerParams(
            dimension_semantics=("arbitrary",)),
    )(q2, k2, v2, wq_f, wk_f, wv_f, wp_f, scale, offset)

    return out2.reshape(B, Lq, Dm)


def multi_head_attn_ref(q, k, v, wq, wk, wv, wp, scale, offset, eps=1e-9):
    """Pure-JAX reference mirroring the PyTorch forward."""
    B, Lq, Dm = q.shape
    H = wq.shape[0]
    heads = []
    for h in range(H):
        hq = q @ wq[h]
        hk = k @ wk[h]
        hv = v @ wv[h]
        attn = jax.nn.softmax((hq @ jnp.swapaxes(hk, 1, 2)) / jnp.sqrt(float(Dm)), axis=-1)
        heads.append(attn @ hv)
    out = jnp.concatenate(heads, axis=-1) @ jnp.concatenate(
        [wp[h] for h in range(H)], axis=0)
    x = out + q
    mean = jnp.mean(x, axis=-1, keepdims=True)
    std = jnp.sqrt(jnp.sum((x - mean) ** 2, axis=-1, keepdims=True) / (Dm - 1))
    return scale * (x - mean) / (std + eps) + offset


if __name__ == "__main__":
    # hparams: d_model=32, n_heads=2, d_k=d_v=16, init_range=0.1, dropout=0
    B, L, D_MODEL, N_HEADS, D_K, D_V = 2, 8, 32, 2, 16, 16
    INIT_RANGE = 0.1

    key = jax.random.PRNGKey(0)
    kq, kk, kv, kwq, kwk, kwv, kwp = jax.random.split(key, 7)

    q = jax.random.normal(kq, (B, L, D_MODEL), dtype=jnp.float32)
    k = jax.random.normal(kk, (B, L, D_MODEL), dtype=jnp.float32)
    v = jax.random.normal(kv, (B, L, D_MODEL), dtype=jnp.float32)

    # nn.Linear weight is [out, in]; we store the right-multiply form [in, out]
    # stacked over heads: [H, d_model, d_k].
    wq = jax.random.uniform(kwq, (N_HEADS, D_MODEL, D_K), dtype=jnp.float32,
                            minval=-INIT_RANGE, maxval=INIT_RANGE)
    wk = jax.random.uniform(kwk, (N_HEADS, D_MODEL, D_K), dtype=jnp.float32,
                            minval=-INIT_RANGE, maxval=INIT_RANGE)
    wv = jax.random.uniform(kwv, (N_HEADS, D_MODEL, D_V), dtype=jnp.float32,
                            minval=-INIT_RANGE, maxval=INIT_RANGE)
    # w_proj: [d_model, H*d_v] in torch ([out,in]); store as [H, d_v, d_model].
    wp = jax.random.uniform(kwp, (N_HEADS, D_V, D_MODEL), dtype=jnp.float32,
                            minval=-INIT_RANGE, maxval=INIT_RANGE)
    scale = jnp.ones((1, D_MODEL), dtype=jnp.float32)
    offset = jnp.zeros((1, D_MODEL), dtype=jnp.float32)

    out = multi_head_attn(q, k, v, wq, wk, wv, wp, scale, offset)
    out = jax.block_until_ready(out)

    ref = multi_head_attn_ref(q, k, v, wq, wk, wv, wp, scale, offset)
    assert out.shape == (B, L, D_MODEL)
    assert jnp.allclose(out, ref, atol=1e-5, rtol=1e-5), "mismatch vs reference"

    print("KERNEL_OK")
</pallas_src>

<mosaic_0001>
module attributes {stable_mosaic.version = 11 : i64} {
  func.func @mha_kernel(%arg0: i32, %arg1: memref<16x32xf32, #tpu.memory_space<vmem>>, %arg2: memref<16x32xf32, #tpu.memory_space<vmem>>, %arg3: memref<16x32xf32, #tpu.memory_space<vmem>>, %arg4: memref<32x32xf32, #tpu.memory_space<vmem>>, %arg5: memref<32x32xf32, #tpu.memory_space<vmem>>, %arg6: memref<32x32xf32, #tpu.memory_space<vmem>>, %arg7: memref<32x32xf32, #tpu.memory_space<vmem>>, %arg8: memref<1x32xf32, #tpu.memory_space<vmem>>, %arg9: memref<1x32xf32, #tpu.memory_space<vmem>>, %arg10: memref<16x32xf32, #tpu.memory_space<vmem>>) attributes {dimension_semantics = [#tpu.dimension_semantics<arbitrary>], iteration_bounds = array<i64: 1>, scalar_prefetch = 0 : i64, scratch_operands = 0 : i64, tpu.core_type = #tpu.core_type<tc>, window_params = [{pipeline_mode = #tpu.pipeline_mode<synchronous>, transform_indices = @transform_0, window_bounds = array<i64: 16, 32>}, {pipeline_mode = #tpu.pipeline_mode<synchronous>, transform_indices = @transform_1, window_bounds = array<i64: 16, 32>}, {pipeline_mode = #tpu.pipeline_mode<synchronous>, transform_indices = @transform_2, window_bounds = array<i64: 16, 32>}, {pipeline_mode = #tpu.pipeline_mode<synchronous>, transform_indices = @transform_3, window_bounds = array<i64: 32, 32>}, {pipeline_mode = #tpu.pipeline_mode<synchronous>, transform_indices = @transform_4, window_bounds = array<i64: 32, 32>}, {pipeline_mode = #tpu.pipeline_mode<synchronous>, transform_indices = @transform_5, window_bounds = array<i64: 32, 32>}, {pipeline_mode = #tpu.pipeline_mode<synchronous>, transform_indices = @transform_6, window_bounds = array<i64: 32, 32>}, {pipeline_mode = #tpu.pipeline_mode<synchronous>, transform_indices = @transform_7, window_bounds = array<i64: 1, 32>}, {pipeline_mode = #tpu.pipeline_mode<synchronous>, transform_indices = @transform_8, window_bounds = array<i64: 1, 32>}, {pipeline_mode = #tpu.pipeline_mode<synchronous>, transform_indices = @transform_9, window_bounds = array<i64: 16, 32>}]} {
    %c0 = arith.constant 0 : index
    %c0_0 = arith.constant 0 : index
    %0 = vector.load %arg1[%c0, %c0_0] : memref<16x32xf32, #tpu.memory_space<vmem>>, vector<16x32xf32>
    %c0_1 = arith.constant 0 : index
    %c0_2 = arith.constant 0 : index
    %1 = vector.load %arg2[%c0_1, %c0_2] : memref<16x32xf32, #tpu.memory_space<vmem>>, vector<16x32xf32>
    %c0_3 = arith.constant 0 : index
    %c0_4 = arith.constant 0 : index
    %2 = vector.load %arg3[%c0_3, %c0_4] : memref<16x32xf32, #tpu.memory_space<vmem>>, vector<16x32xf32>
    %c0_5 = arith.constant 0 : index
    %c0_6 = arith.constant 0 : index
    %3 = vector.load %arg4[%c0_5, %c0_6] : memref<32x32xf32, #tpu.memory_space<vmem>>, vector<32x32xf32>
    %cst = arith.constant dense<0.000000e+00> : vector<16x32xf32>
    %4 = tpu.matmul %0, %3, %cst {dimension_numbers = #tpu.dot_dimension_numbers<[1], [0], [0], [1], [0, 0, 1, 1], [], []>} : vector<16x32xf32>, vector<32x32xf32>, vector<16x32xf32> -> vector<16x32xf32>
    %c0_7 = arith.constant 0 : index
    %c0_8 = arith.constant 0 : index
    %5 = vector.load %arg5[%c0_7, %c0_8] : memref<32x32xf32, #tpu.memory_space<vmem>>, vector<32x32xf32>
    %cst_9 = arith.constant dense<0.000000e+00> : vector<16x32xf32>
    %6 = tpu.matmul %1, %5, %cst_9 {dimension_numbers = #tpu.dot_dimension_numbers<[1], [0], [0], [1], [0, 0, 1, 1], [], []>} : vector<16x32xf32>, vector<32x32xf32>, vector<16x32xf32> -> vector<16x32xf32>
    %c0_10 = arith.constant 0 : index
    %c0_11 = arith.constant 0 : index
    %7 = vector.load %arg6[%c0_10, %c0_11] : memref<32x32xf32, #tpu.memory_space<vmem>>, vector<32x32xf32>
    %cst_12 = arith.constant dense<0.000000e+00> : vector<16x32xf32>
    %8 = tpu.matmul %2, %7, %cst_12 {dimension_numbers = #tpu.dot_dimension_numbers<[1], [0], [0], [1], [0, 0, 1, 1], [], []>} : vector<16x32xf32>, vector<32x32xf32>, vector<16x32xf32> -> vector<16x32xf32>
    %c0_13 = arith.constant 0 : index
    %c0_14 = arith.constant 0 : index
    %9 = vector.load %arg8[%c0_13, %c0_14] : memref<1x32xf32, #tpu.memory_space<vmem>>, vector<1x32xf32>
    %c0_15 = arith.constant 0 : index
    %c0_16 = arith.constant 0 : index
    %10 = vector.load %arg9[%c0_15, %c0_16] : memref<1x32xf32, #tpu.memory_space<vmem>>, vector<1x32xf32>
    %cst_17 = arith.constant 0.000000e+00 : f32
    %11 = vector.broadcast %cst_17 : f32 to vector<8x32xf32>
    %12 = vector.extract_strided_slice %4 {offsets = [0, 0], sizes = [8, 16], strides = [1, 1]} : vector<16x32xf32> to vector<8x16xf32>
    %13 = vector.extract_strided_slice %6 {offsets = [0, 0], sizes = [8, 16], strides = [1, 1]} : vector<16x32xf32> to vector<8x16xf32>
    %14 = vector.extract_strided_slice %8 {offsets = [0, 0], sizes = [8, 16], strides = [1, 1]} : vector<16x32xf32> to vector<8x16xf32>
    %15 = tpu.transpose %13, [1, 0] : vector<8x16xf32> -> vector<16x8xf32>
    %cst_18 = arith.constant dense<0.000000e+00> : vector<8x8xf32>
    %16 = tpu.matmul %12, %15, %cst_18 {dimension_numbers = #tpu.dot_dimension_numbers<[1], [0], [0], [1], [0, 0, 1, 1], [], []>} : vector<8x16xf32>, vector<16x8xf32>, vector<8x8xf32> -> vector<8x8xf32>
    %cst_19 = arith.constant dense<0xFF800000> : vector<8xf32>
    %17 = vector.multi_reduction <maximumf>, %16, %cst_19 [1] : vector<8x8xf32> to vector<8xf32>
    %18 = vector.shape_cast %17 : vector<8xf32> to vector<8x1xf32>
    %19 = vector.broadcast %18 : vector<8x1xf32> to vector<8x8xf32>
    %20 = arith.subf %16, %19 : vector<8x8xf32>
    %21 = math.exp %20 : vector<8x8xf32>
    %cst_20 = arith.constant dense<0.000000e+00> : vector<8xf32>
    %22 = vector.multi_reduction <add>, %21, %cst_20 [1] : vector<8x8xf32> to vector<8xf32>
    %23 = vector.shape_cast %22 : vector<8xf32> to vector<8x1xf32>
    %cst_21 = arith.constant dense<0.000000e+00> : vector<8x16xf32>
    %24 = tpu.matmul %21, %14, %cst_21 {dimension_numbers = #tpu.dot_dimension_numbers<[1], [0], [0], [1], [0, 0, 1, 1], [], []>} : vector<8x8xf32>, vector<8x16xf32>, vector<8x16xf32> -> vector<8x16xf32>
    %25 = tpu.reciprocal %23 : vector<8x1xf32> -> vector<8x1xf32>
    %26 = vector.broadcast %25 : vector<8x1xf32> to vector<8x16xf32>
    %27 = arith.mulf %24, %26 : vector<8x16xf32>
    %c0_22 = arith.constant 0 : index
    %c0_23 = arith.constant 0 : index
    %28 = vector.load %arg7[%c0_22, %c0_23] : memref<32x32xf32, #tpu.memory_space<vmem>>, vector<16x32xf32>
    %cst_24 = arith.constant dense<0.000000e+00> : vector<8x32xf32>
    %29 = tpu.matmul %27, %28, %cst_24 {dimension_numbers = #tpu.dot_dimension_numbers<[1], [0], [0], [1], [0, 0, 1, 1], [], []>} : vector<8x16xf32>, vector<16x32xf32>, vector<8x32xf32> -> vector<8x32xf32>
    %30 = arith.addf %11, %29 : vector<8x32xf32>
    %31 = vector.extract_strided_slice %4 {offsets = [0, 16], sizes = [8, 16], strides = [1, 1]} : vector<16x32xf32> to vector<8x16xf32>
    %32 = vector.extract_strided_slice %6 {offsets = [0, 16], sizes = [8, 16], strides = [1, 1]} : vector<16x32xf32> to vector<8x16xf32>
    %33 = vector.extract_strided_slice %8 {offsets = [0, 16], sizes = [8, 16], strides = [1, 1]} : vector<16x32xf32> to vector<8x16xf32>
    %34 = tpu.transpose %32, [1, 0] : vector<8x16xf32> -> vector<16x8xf32>
    %cst_25 = arith.constant dense<0.000000e+00> : vector<8x8xf32>
    %35 = tpu.matmul %31, %34, %cst_25 {dimension_numbers = #tpu.dot_dimension_numbers<[1], [0], [0], [1], [0, 0, 1, 1], [], []>} : vector<8x16xf32>, vector<16x8xf32>, vector<8x8xf32> -> vector<8x8xf32>
    %cst_26 = arith.constant dense<0xFF800000> : vector<8xf32>
    %36 = vector.multi_reduction <maximumf>, %35, %cst_26 [1] : vector<8x8xf32> to vector<8xf32>
    %37 = vector.shape_cast %36 : vector<8xf32> to vector<8x1xf32>
    %38 = vector.broadcast %37 : vector<8x1xf32> to vector<8x8xf32>
    %39 = arith.subf %35, %38 : vector<8x8xf32>
    %40 = math.exp %39 : vector<8x8xf32>
    %cst_27 = arith.constant dense<0.000000e+00> : vector<8xf32>
    %41 = vector.multi_reduction <add>, %40, %cst_27 [1] : vector<8x8xf32> to vector<8xf32>
    %42 = vector.shape_cast %41 : vector<8xf32> to vector<8x1xf32>
    %cst_28 = arith.constant dense<0.000000e+00> : vector<8x16xf32>
    %43 = tpu.matmul %40, %33, %cst_28 {dimension_numbers = #tpu.dot_dimension_numbers<[1], [0], [0], [1], [0, 0, 1, 1], [], []>} : vector<8x8xf32>, vector<8x16xf32>, vector<8x16xf32> -> vector<8x16xf32>
    %44 = tpu.reciprocal %42 : vector<8x1xf32> -> vector<8x1xf32>
    %45 = vector.broadcast %44 : vector<8x1xf32> to vector<8x16xf32>
    %46 = arith.mulf %43, %45 : vector<8x16xf32>
    %c16 = arith.constant 16 : index
    %c0_29 = arith.constant 0 : index
    %47 = vector.load %arg7[%c16, %c0_29] : memref<32x32xf32, #tpu.memory_space<vmem>>, vector<16x32xf32>
    %cst_30 = arith.constant dense<0.000000e+00> : vector<8x32xf32>
    %48 = tpu.matmul %46, %47, %cst_30 {dimension_numbers = #tpu.dot_dimension_numbers<[1], [0], [0], [1], [0, 0, 1, 1], [], []>} : vector<8x16xf32>, vector<16x32xf32>, vector<8x32xf32> -> vector<8x32xf32>
    %49 = arith.addf %30, %48 : vector<8x32xf32>
    %50 = vector.extract_strided_slice %0 {offsets = [0, 0], sizes = [8, 32], strides = [1, 1]} : vector<16x32xf32> to vector<8x32xf32>
    %51 = arith.addf %49, %50 : vector<8x32xf32>
    %cst_31 = arith.constant dense<0.000000e+00> : vector<8xf32>
    %52 = vector.multi_reduction <add>, %51, %cst_31 [1] : vector<8x32xf32> to vector<8xf32>
    %53 = vector.shape_cast %52 : vector<8xf32> to vector<8x1xf32>
    %cst_32 = arith.constant 3.200000e+01 : f32
    %54 = vector.broadcast %cst_32 : f32 to vector<8x1xf32>
    %55 = arith.divf %53, %54 : vector<8x1xf32>
    %56 = vector.broadcast %55 : vector<8x1xf32> to vector<8x32xf32>
    %57 = arith.subf %51, %56 : vector<8x32xf32>
    %58 = arith.mulf %57, %57 : vector<8x32xf32>
    %cst_33 = arith.constant dense<0.000000e+00> : vector<8xf32>
    %59 = vector.multi_reduction <add>, %58, %cst_33 [1] : vector<8x32xf32> to vector<8xf32>
    %60 = vector.shape_cast %59 : vector<8xf32> to vector<8x1xf32>
    %cst_34 = arith.constant 3.100000e+01 : f32
    %61 = vector.broadcast %cst_34 : f32 to vector<8x1xf32>
    %62 = arith.divf %60, %61 : vector<8x1xf32>
    %63 = math.sqrt %62 : vector<8x1xf32>
    %cst_35 = arith.constant 9.99999971E-10 : f32
    %64 = vector.broadcast %cst_35 : f32 to vector<8x1xf32>
    %65 = arith.addf %63, %64 : vector<8x1xf32>
    %66 = tpu.reciprocal %65 : vector<8x1xf32> -> vector<8x1xf32>
    %67 = vector.broadcast %55 : vector<8x1xf32> to vector<8x32xf32>
    %68 = arith.subf %51, %67 : vector<8x32xf32>
    %69 = vector.broadcast %9 : vector<1x32xf32> to vector<8x32xf32>
    %70 = arith.mulf %69, %68 : vector<8x32xf32>
    %71 = vector.broadcast %66 : vector<8x1xf32> to vector<8x32xf32>
    %72 = arith.mulf %70, %71 : vector<8x32xf32>
    %73 = vector.broadcast %10 : vector<1x32xf32> to vector<8x32xf32>
    %74 = arith.addf %72, %73 : vector<8x32xf32>
    %c0_36 = arith.constant 0 : index
    %c0_37 = arith.constant 0 : index
    %75 = vector.load %arg10[%c0_36, %c0_37] : memref<16x32xf32, #tpu.memory_space<vmem>>, vector<8x32xf32>
    tpu.vector_store %arg10[%c0_36, %c0_37], %74 {strides = array<i32>} : memref<16x32xf32, #tpu.memory_space<vmem>>, vector<8x32xf32>,
    %cst_38 = arith.constant 0.000000e+00 : f32
    %76 = vector.broadcast %cst_38 : f32 to vector<8x32xf32>
    %77 = vector.extract_strided_slice %4 {offsets = [8, 0], sizes = [8, 16], strides = [1, 1]} : vector<16x32xf32> to vector<8x16xf32>
    %78 = vector.extract_strided_slice %6 {offsets = [8, 0], sizes = [8, 16], strides = [1, 1]} : vector<16x32xf32> to vector<8x16xf32>
    %79 = vector.extract_strided_slice %8 {offsets = [8, 0], sizes = [8, 16], strides = [1, 1]} : vector<16x32xf32> to vector<8x16xf32>
    %80 = tpu.transpose %78, [1, 0] : vector<8x16xf32> -> vector<16x8xf32>
    %cst_39 = arith.constant dense<0.000000e+00> : vector<8x8xf32>
    %81 = tpu.matmul %77, %80, %cst_39 {dimension_numbers = #tpu.dot_dimension_numbers<[1], [0], [0], [1], [0, 0, 1, 1], [], []>} : vector<8x16xf32>, vector<16x8xf32>, vector<8x8xf32> -> vector<8x8xf32>
    %cst_40 = arith.constant dense<0xFF800000> : vector<8xf32>
    %82 = vector.multi_reduction <maximumf>, %81, %cst_40 [1] : vector<8x8xf32> to vector<8xf32>
    %83 = vector.shape_cast %82 : vector<8xf32> to vector<8x1xf32>
    %84 = vector.broadcast %83 : vector<8x1xf32> to vector<8x8xf32>
    %85 = arith.subf %81, %84 : vector<8x8xf32>
    %86 = math.exp %85 : vector<8x8xf32>
    %cst_41 = arith.constant dense<0.000000e+00> : vector<8xf32>
    %87 = vector.multi_reduction <add>, %86, %cst_41 [1] : vector<8x8xf32> to vector<8xf32>
    %88 = vector.shape_cast %87 : vector<8xf32> to vector<8x1xf32>
    %cst_42 = arith.constant dense<0.000000e+00> : vector<8x16xf32>
    %89 = tpu.matmul %86, %79, %cst_42 {dimension_numbers = #tpu.dot_dimension_numbers<[1], [0], [0], [1], [0, 0, 1, 1], [], []>} : vector<8x8xf32>, vector<8x16xf32>, vector<8x16xf32> -> vector<8x16xf32>
    %90 = tpu.reciprocal %88 : vector<8x1xf32> -> vector<8x1xf32>
    %91 = vector.broadcast %90 : vector<8x1xf32> to vector<8x16xf32>
    %92 = arith.mulf %89, %91 : vector<8x16xf32>
    %c0_43 = arith.constant 0 : index
    %c0_44 = arith.constant 0 : index
    %93 = vector.load %arg7[%c0_43, %c0_44] : memref<32x32xf32, #tpu.memory_space<vmem>>, vector<16x32xf32>
    %cst_45 = arith.constant dense<0.000000e+00> : vector<8x32xf32>
    %94 = tpu.matmul %92, %93, %cst_45 {dimension_numbers = #tpu.dot_dimension_numbers<[1], [0], [0], [1], [0, 0, 1, 1], [], []>} : vector<8x16xf32>, vector<16x32xf32>, vector<8x32xf32> -> vector<8x32xf32>
    %95 = arith.addf %76, %94 : vector<8x32xf32>
    %96 = vector.extract_strided_slice %4 {offsets = [8, 16], sizes = [8, 16], strides = [1, 1]} : vector<16x32xf32> to vector<8x16xf32>
    %97 = vector.extract_strided_slice %6 {offsets = [8, 16], sizes = [8, 16], strides = [1, 1]} : vector<16x32xf32> to vector<8x16xf32>
    %98 = vector.extract_strided_slice %8 {offsets = [8, 16], sizes = [8, 16], strides = [1, 1]} : vector<16x32xf32> to vector<8x16xf32>
    %99 = tpu.transpose %97, [1, 0] : vector<8x16xf32> -> vector<16x8xf32>
    %cst_46 = arith.constant dense<0.000000e+00> : vector<8x8xf32>
    %100 = tpu.matmul %96, %99, %cst_46 {dimension_numbers = #tpu.dot_dimension_numbers<[1], [0], [0], [1], [0, 0, 1, 1], [], []>} : vector<8x16xf32>, vector<16x8xf32>, vector<8x8xf32> -> vector<8x8xf32>
    %cst_47 = arith.constant dense<0xFF800000> : vector<8xf32>
    %101 = vector.multi_reduction <maximumf>, %100, %cst_47 [1] : vector<8x8xf32> to vector<8xf32>
    %102 = vector.shape_cast %101 : vector<8xf32> to vector<8x1xf32>
    %103 = vector.broadcast %102 : vector<8x1xf32> to vector<8x8xf32>
    %104 = arith.subf %100, %103 : vector<8x8xf32>
    %105 = math.exp %104 : vector<8x8xf32>
    %cst_48 = arith.constant dense<0.000000e+00> : vector<8xf32>
    %106 = vector.multi_reduction <add>, %105, %cst_48 [1] : vector<8x8xf32> to vector<8xf32>
    %107 = vector.shape_cast %106 : vector<8xf32> to vector<8x1xf32>
    %cst_49 = arith.constant dense<0.000000e+00> : vector<8x16xf32>
    %108 = tpu.matmul %105, %98, %cst_49 {dimension_numbers = #tpu.dot_dimension_numbers<[1], [0], [0], [1], [0, 0, 1, 1], [], []>} : vector<8x8xf32>, vector<8x16xf32>, vector<8x16xf32> -> vector<8x16xf32>
    %109 = tpu.reciprocal %107 : vector<8x1xf32> -> vector<8x1xf32>
    %110 = vector.broadcast %109 : vector<8x1xf32> to vector<8x16xf32>
    %111 = arith.mulf %108, %110 : vector<8x16xf32>
    %c16_50 = arith.constant 16 : index
    %c0_51 = arith.constant 0 : index
    %112 = vector.load %arg7[%c16_50, %c0_51] : memref<32x32xf32, #tpu.memory_space<vmem>>, vector<16x32xf32>
    %cst_52 = arith.constant dense<0.000000e+00> : vector<8x32xf32>
    %113 = tpu.matmul %111, %112, %cst_52 {dimension_numbers = #tpu.dot_dimension_numbers<[1], [0], [0], [1], [0, 0, 1, 1], [], []>} : vector<8x16xf32>, vector<16x32xf32>, vector<8x32xf32> -> vector<8x32xf32>
    %114 = arith.addf %95, %113 : vector<8x32xf32>
    %115 = vector.extract_strided_slice %0 {offsets = [8, 0], sizes = [8, 32], strides = [1, 1]} : vector<16x32xf32> to vector<8x32xf32>
    %116 = arith.addf %114, %115 : vector<8x32xf32>
    %cst_53 = arith.constant dense<0.000000e+00> : vector<8xf32>
    %117 = vector.multi_reduction <add>, %116, %cst_53 [1] : vector<8x32xf32> to vector<8xf32>
    %118 = vector.shape_cast %117 : vector<8xf32> to vector<8x1xf32>
    %cst_54 = arith.constant 3.200000e+01 : f32
    %119 = vector.broadcast %cst_54 : f32 to vector<8x1xf32>
    %120 = arith.divf %118, %119 : vector<8x1xf32>
    %121 = vector.broadcast %120 : vector<8x1xf32> to vector<8x32xf32>
    %122 = arith.subf %116, %121 : vector<8x32xf32>
    %123 = arith.mulf %122, %122 : vector<8x32xf32>
    %cst_55 = arith.constant dense<0.000000e+00> : vector<8xf32>
    %124 = vector.multi_reduction <add>, %123, %cst_55 [1] : vector<8x32xf32> to vector<8xf32>
    %125 = vector.shape_cast %124 : vector<8xf32> to vector<8x1xf32>
    %cst_56 = arith.constant 3.100000e+01 : f32
    %126 = vector.broadcast %cst_56 : f32 to vector<8x1xf32>
    %127 = arith.divf %125, %126 : vector<8x1xf32>
    %128 = math.sqrt %127 : vector<8x1xf32>
    %cst_57 = arith.constant 9.99999971E-10 : f32
    %129 = vector.broadcast %cst_57 : f32 to vector<8x1xf32>
    %130 = arith.addf %128, %129 : vector<8x1xf32>
    %131 = tpu.reciprocal %130 : vector<8x1xf32> -> vector<8x1xf32>
    %132 = vector.broadcast %120 : vector<8x1xf32> to vector<8x32xf32>
    %133 = arith.subf %116, %132 : vector<8x32xf32>
    %134 = vector.broadcast %9 : vector<1x32xf32> to vector<8x32xf32>
    %135 = arith.mulf %134, %133 : vector<8x32xf32>
    %136 = vector.broadcast %131 : vector<8x1xf32> to vector<8x32xf32>
    %137 = arith.mulf %135, %136 : vector<8x32xf32>
    %138 = vector.broadcast %10 : vector<1x32xf32> to vector<8x32xf32>
    %139 = arith.addf %137, %138 : vector<8x32xf32>
    %c8 = arith.constant 8 : index
    %c0_58 = arith.constant 0 : index
    %140 = vector.load %arg10[%c8, %c0_58] : memref<16x32xf32, #tpu.memory_space<vmem>>, vector<8x32xf32>
    tpu.vector_store %arg10[%c8, %c0_58], %139 {strides = array<i32>} : memref<16x32xf32, #tpu.memory_space<vmem>>, vector<8x32xf32>,
    return
  }
  func.func @transform_0(%arg0: i32) -> (i32, i32) {
    %c0_i32 = arith.constant 0 : i32
    %c0_i32_0 = arith.constant 0 : i32
    %c0_i32_1 = arith.constant 0 : i32
    return %c0_i32, %c0_i32_0 : i32, i32
  }
  func.func @transform_1(%arg0: i32) -> (i32, i32) {
    %c0_i32 = arith.constant 0 : i32
    %c0_i32_0 = arith.constant 0 : i32
    %c0_i32_1 = arith.constant 0 : i32
    return %c0_i32, %c0_i32_0 : i32, i32
  }
  func.func @transform_2(%arg0: i32) -> (i32, i32) {
    %c0_i32 = arith.constant 0 : i32
    %c0_i32_0 = arith.constant 0 : i32
    %c0_i32_1 = arith.constant 0 : i32
    return %c0_i32, %c0_i32_0 : i32, i32
  }
  func.func @transform_3(%arg0: i32) -> (i32, i32) {
    %c0_i32 = arith.constant 0 : i32
    %c0_i32_0 = arith.constant 0 : i32
    %c0_i32_1 = arith.constant 0 : i32
    return %c0_i32, %c0_i32_0 : i32, i32
  }
  func.func @transform_4(%arg0: i32) -> (i32, i32) {
    %c0_i32 = arith.constant 0 : i32
    %c0_i32_0 = arith.constant 0 : i32
    %c0_i32_1 = arith.constant 0 : i32
    return %c0_i32, %c0_i32_0 : i32, i32
  }
  func.func @transform_5(%arg0: i32) -> (i32, i32) {
    %c0_i32 = arith.constant 0 : i32
    %c0_i32_0 = arith.constant 0 : i32
    %c0_i32_1 = arith.constant 0 : i32
    return %c0_i32, %c0_i32_0 : i32, i32
  }
  func.func @transform_6(%arg0: i32) -> (i32, i32) {
    %c0_i32 = arith.constant 0 : i32
    %c0_i32_0 = arith.constant 0 : i32
    %c0_i32_1 = arith.constant 0 : i32
    return %c0_i32, %c0_i32_0 : i32, i32
  }
  func.func @transform_7(%arg0: i32) -> (i32, i32) {
    %c0_i32 = arith.constant 0 : i32
    %c0_i32_0 = arith.constant 0 : i32
    %c0_i32_1 = arith.constant 0 : i32
    return %c0_i32, %c0_i32_0 : i32, i32
  }
  func.func @transform_8(%arg0: i32) -> (i32, i32) {
    %c0_i32 = arith.constant 0 : i32
    %c0_i32_0 = arith.constant 0 : i32
    %c0_i32_1 = arith.constant 0 : i32
    return %c0_i32, %c0_i32_0 : i32, i32
  }
  func.func @transform_9(%arg0: i32) -> (i32, i32) {
    %c0_i32 = arith.constant 0 : i32
    %c0_i32_0 = arith.constant 0 : i32
    %c0_i32_1 = arith.constant 0 : i32
    return %c0_i32, %c0_i32_0 : i32, i32
  }
}

</mosaic_0001>

<llo_original>
// kernel: tpu_custom_call.1
$region0: #{tpu_custom_call.1}
  #allocation0 [shape = 'u32[]', space=smem, size = 0x4, offset = 0x4, fixed_abs, tag = 'smem constant byte address 0x4 - core index']
  #allocation1 [shape = 'u32[144,128]{1,0:T(1,128)}', space=vmem, size = 0x12000, scoped, tag = 'internal scratch']
  %s0 = inlined_call_operand.hbm [shape: f32[16,32], index: 0, kind: input, shape index: {}]
  %s1 = inlined_call_operand.hbm [shape: f32[16,32], index: 1, kind: input, shape index: {}]
  %s2 = inlined_call_operand.hbm [shape: f32[16,32], index: 2, kind: input, shape index: {}]
  %s3 = inlined_call_operand.hbm [shape: f32[32,32], index: 3, kind: input, shape index: {}]
  %s4 = inlined_call_operand.hbm [shape: f32[32,32], index: 4, kind: input, shape index: {}]
  %s5 = inlined_call_operand.hbm [shape: f32[32,32], index: 5, kind: input, shape index: {}]
  %s6 = inlined_call_operand.hbm [shape: f32[32,32], index: 6, kind: input, shape index: {}]
  %s7 = inlined_call_operand.vmem [shape: f32[1,32], index: 7, kind: input, shape index: {}]
  %s8 = inlined_call_operand.vmem [shape: f32[1,32], index: 8, kind: input, shape index: {}]
  %s9 = inlined_call_operand.hbm [shape: f32[16,32], index: 9, kind: output, shape index: {}]
  %s10 = sld [smem:[#allocation0]]
  $region74: #{tpu_custom_call.1} parent=0
    _
  %s12 = ssub.s32 1, %s10
  %s13 = scalar_select 0, %s12, %s10
  $region1: #{tpu_custom_call.1} parent=0
    #allocation2 [shape = 'u8[8192]{0}', space=vmem, size = 0x2000, scoped, tag = 'input window, operand 0, single buffered']
    #allocation3 [shape = 's32[1]{0}', space=sflag, size = 0x4, scoped, tag = 'scoped memory for tpu_custom_call.1']
    #allocation4 [shape = 's32[1]{0}', space=sflag, size = 0x4, scoped, tag = 'scoped memory for tpu_custom_call.1']
    #allocation5 [shape = 'u8[8192]{0}', space=vmem, size = 0x2000, scoped, tag = 'input window, operand 1, single buffered']
    #allocation6 [shape = 's32[1]{0}', space=sflag, size = 0x4, scoped, tag = 'scoped memory for tpu_custom_call.1']
    #allocation7 [shape = 'u8[8192]{0}', space=vmem, size = 0x2000, scoped, tag = 'input window, operand 2, single buffered']
    #allocation8 [shape = 'u8[16384]{0}', space=vmem, size = 0x4000, scoped, tag = 'input window, operand 3, single buffered']
    #allocation9 [shape = 's32[1]{0}', space=sflag, size = 0x4, scoped, tag = 'scoped memory for tpu_custom_call.1']
    #allocation10 [shape = 'u8[16384]{0}', space=vmem, size = 0x4000, scoped, tag = 'input window, operand 4, single buffered']
    #allocation11 [shape = 'u8[16384]{0}', space=vmem, size = 0x4000, scoped, tag = 'input window, operand 5, single buffered']
    #allocation12 [shape = 's32[1]{0}', space=sflag, size = 0x4, scoped, tag = 'scoped memory for tpu_custom_call.1']
    #allocation13 [shape = 'u8[16384]{0}', space=vmem, size = 0x4000, scoped, tag = 'input window, operand 6, single buffered']
    #allocation14 [shape = 'u8[8192]{0}', space=vmem, size = 0x2000, scoped, tag = 'output window, operand 0, single buffered']
    %14 = vsyncpa [#allocation3], 0
    %15 = vsyncpa [#allocation6], 0
    %16 = vsyncpa [#allocation9], 0
    %17 = vsyncpa [#allocation12], 0
    %18 = vsyncpa [#allocation4], 0
    // Predicated region
    $region2: #{tpu_custom_call.1} parent=1 // pred_check
      _
    $region3: #{tpu_custom_call.1} parent=1 // pred_check_branch
      %20 = sbr.rel (0) target = $region5
    $region4: #{tpu_custom_call.1} parent=1 // pred_region
      %s22 = ssub.s32 256, 256
      %23 = vsyncadd [#allocation3], %s22
      %s24 = sshll.u32 [#allocation2], 4
      %s25 = int_to_ptr.vmem [resolvable:$true] %s24
      %30 = dma.hbm_to_vmem [thread:$0]  %s0, 256, %s25, [#allocation3], 128, 128, 8
    $region5: #{tpu_custom_call.1} parent=1 // pred_fallthru
      _
    // Predicated region
    $region6: #{tpu_custom_call.1} parent=1 // pred_check
      _
    $region7: #{tpu_custom_call.1} parent=1 // pred_check_branch
      %32 = sbr.rel (0) target = $region9
    $region8: #{tpu_custom_call.1} parent=1 // pred_region
      %s34 = ssub.s32 256, 256
      %35 = vsyncadd [#allocation6], %s34
      %s36 = sshll.u32 [#allocation5], 4
      %s37 = int_to_ptr.vmem [resolvable:$true] %s36
      %42 = dma.hbm_to_vmem [thread:$0]  %s1, 256, %s37, [#allocation6], 128, 128, 8
    $region9: #{tpu_custom_call.1} parent=1 // pred_fallthru
      _
    // Predicated region
    $region10: #{tpu_custom_call.1} parent=1 // pred_check
      _
    $region11: #{tpu_custom_call.1} parent=1 // pred_check_branch
      %44 = sbr.rel (0) target = $region13
    $region12: #{tpu_custom_call.1} parent=1 // pred_region
      %s46 = ssub.s32 256, 256
      %47 = vsyncadd [#allocation6], %s46
      %s48 = sshll.u32 [#allocation7], 4
      %s49 = int_to_ptr.vmem [resolvable:$true] %s48
      %54 = dma.hbm_to_vmem [thread:$0]  %s2, 256, %s49, [#allocation6], 128, 128, 8
    $region13: #{tpu_custom_call.1} parent=1 // pred_fallthru
      _
    // Predicated region
    $region14: #{tpu_custom_call.1} parent=1 // pred_check
      _
    $region15: #{tpu_custom_call.1} parent=1 // pred_check_branch
      %56 = sbr.rel (0) target = $region17
    $region16: #{tpu_custom_call.1} parent=1 // pred_region
      %s58 = ssub.s32 512, 512
      %59 = vsyncadd [#allocation9], %s58
      %s60 = sshll.u32 [#allocation8], 4
      %s61 = int_to_ptr.vmem [resolvable:$true] %s60
      %66 = dma.hbm_to_vmem [thread:$0]  %s3, 512, %s61, [#allocation9], 128, 128, 8
    $region17: #{tpu_custom_call.1} parent=1 // pred_fallthru
      _
    // Predicated region
    $region18: #{tpu_custom_call.1} parent=1 // pred_check
      _
    $region19: #{tpu_custom_call.1} parent=1 // pred_check_branch
      %68 = sbr.rel (0) target = $region21
    $region20: #{tpu_custom_call.1} parent=1 // pred_region
      %s70 = ssub.s32 512, 512
      %71 = vsyncadd [#allocation9], %s70
      %s72 = sshll.u32 [#allocation10], 4
      %s73 = int_to_ptr.vmem [resolvable:$true] %s72
      %78 = dma.hbm_to_vmem [thread:$0]  %s4, 512, %s73, [#allocation9], 128, 128, 8
    $region21: #{tpu_custom_call.1} parent=1 // pred_fallthru
      _
    // Predicated region
    $region22: #{tpu_custom_call.1} parent=1 // pred_check
      _
    $region23: #{tpu_custom_call.1} parent=1 // pred_check_branch
      %80 = sbr.rel (0) target = $region25
    $region24: #{tpu_custom_call.1} parent=1 // pred_region
      %s82 = ssub.s32 512, 512
      %83 = vsyncadd [#allocation12], %s82
      %s84 = sshll.u32 [#allocation11], 4
      %s85 = int_to_ptr.vmem [resolvable:$true] %s84
      %90 = dma.hbm_to_vmem [thread:$0]  %s5, 512, %s85, [#allocation12], 128, 128, 8
    $region25: #{tpu_custom_call.1} parent=1 // pred_fallthru
      _
    // Predicated region
    $region26: #{tpu_custom_call.1} parent=1 // pred_check
      _
    $region27: #{tpu_custom_call.1} parent=1 // pred_check_branch
      %92 = sbr.rel (0) target = $region29
    $region28: #{tpu_custom_call.1} parent=1 // pred_region
      %s94 = ssub.s32 512, 512
      %95 = vsyncadd [#allocation12], %s94
      %s96 = sshll.u32 [#allocation13], 4
      %s97 = int_to_ptr.vmem [resolvable:$true] %s96
      %102 = dma.hbm_to_vmem [thread:$0]  %s6, 512, %s97, [#allocation12], 128, 128, 8
    $region29: #{tpu_custom_call.1} parent=1 // pred_fallthru
      _
    // Predicated region
    $region30: #{tpu_custom_call.1} parent=1 // pred_check
      _
    $region31: #{tpu_custom_call.1} parent=1 // pred_check_branch
      %104 = sbr.rel (0) target = $region33
    $region32: #{tpu_custom_call.1} parent=1 // pred_region
      _
    $region33: #{tpu_custom_call.1} parent=1 // pred_fallthru
      _
    // Predicated region
    $region34: #{tpu_custom_call.1} parent=1 // pred_check
      _
    $region35: #{tpu_custom_call.1} parent=1 // pred_check_branch
      %106 = sbr.rel (0) target = $region37
    $region36: #{tpu_custom_call.1} parent=1 // pred_region
      _
    $region37: #{tpu_custom_call.1} parent=1 // pred_fallthru
      _
    // Predicated region
    $region38: #{tpu_custom_call.1} parent=1 // pred_check
      _
    $region39: #{tpu_custom_call.1} parent=1 // pred_check_branch
      %108 = sbr.rel (0) target = $region41
    $region40: #{tpu_custom_call.1} parent=1 // pred_region
      %109 = dma.done [#allocation3], 256
    $region41: #{tpu_custom_call.1} parent=1 // pred_fallthru
      _
    // Predicated region
    $region42: #{tpu_custom_call.1} parent=1 // pred_check
      _
    $region43: #{tpu_custom_call.1} parent=1 // pred_check_branch
      %111 = sbr.rel (0) target = $region45
    $region44: #{tpu_custom_call.1} parent=1 // pred_region
      %112 = dma.done [#allocation6], 256
    $region45: #{tpu_custom_call.1} parent=1 // pred_fallthru
      _
    // Predicated region
    $region46: #{tpu_custom_call.1} parent=1 // pred_check
      _
    $region47: #{tpu_custom_call.1} parent=1 // pred_check_branch
      %114 = sbr.rel (0) target = $region49
    $region48: #{tpu_custom_call.1} parent=1 // pred_region
      %115 = dma.done [#allocation6], 256
    $region49: #{tpu_custom_call.1} parent=1 // pred_fallthru
      _
    // Predicated region
    $region50: #{tpu_custom_call.1} parent=1 // pred_check
      _
    $region51: #{tpu_custom_call.1} parent=1 // pred_check_branch
      %117 = sbr.rel (0) target = $region53
    $region52: #{tpu_custom_call.1} parent=1 // pred_region
      %118 = dma.done [#allocation9], 512
    $region53: #{tpu_custom_call.1} parent=1 // pred_fallthru
      _
    // Predicated region
    $region54: #{tpu_custom_call.1} parent=1 // pred_check
      _
    $region55: #{tpu_custom_call.1} parent=1 // pred_check_branch
      %120 = sbr.rel (0) target = $region57
    $region56: #{tpu_custom_call.1} parent=1 // pred_region
      %121 = dma.done [#allocation9], 512
    $region57: #{tpu_custom_call.1} parent=1 // pred_fallthru
      _
    // Predicated region
    $region58: #{tpu_custom_call.1} parent=1 // pred_check
      _
    $region59: #{tpu_custom_call.1} parent=1 // pred_check_branch
      %123 = sbr.rel (0) target = $region61
    $region60: #{tpu_custom_call.1} parent=1 // pred_region
      %124 = dma.done [#allocation12], 512
    $region61: #{tpu_custom_call.1} parent=1 // pred_fallthru
      _
    // Predicated region
    $region62: #{tpu_custom_call.1} parent=1 // pred_check
      _
    $region63: #{tpu_custom_call.1} parent=1 // pred_check_branch
      %126 = sbr.rel (0) target = $region65
    $region64: #{tpu_custom_call.1} parent=1 // pred_region
      %127 = dma.done [#allocation12], 512
    $region65: #{tpu_custom_call.1} parent=1 // pred_fallthru
      _
    %v128 = vld [vmem:[#allocation2] sm:$0xff]
    %v129 = vld [vmem:[#allocation2 + $0x8] sm:$0xff]
    %v130 = vld [vmem:[#allocation5] sm:$0xff]
    %v131 = vld [vmem:[#allocation5 + $0x8] sm:$0xff]
    %v132 = vld [vmem:[#allocation7] sm:$0xff]
    %v133 = vld [vmem:[#allocation7 + $0x8] sm:$0xff]
    %v134 = vld [vmem:[#allocation8] sm:$0xff]
    %v135 = vld [vmem:[#allocation8 + $0x8] sm:$0xff]
    %v136 = vld [vmem:[#allocation8 + $0x10] sm:$0xff]
    %v137 = vld [vmem:[#allocation8 + $0x18] sm:$0xff]
    %vm138 = vcmask 261120
    %v140 = vsel %vm138, %v128, 0
    %v143 = vsel %vm138, %v129, 0
    %145 = vmatprep.subr.mxu0 0.0
    %146 = vmatpush1.msra.mxu0 %v134
    %147 = vmatprep.subr.mxu0 0.0
    %148 = vmatpush1.msra.mxu0 %v135
    %149 = vmatprep.subr.mxu0 0.0
    %150 = vmatpush1.msra.mxu0 %v136
    %151 = vmatprep.subr.mxu0 0.0
    %152 = vmatpush1.msra.mxu0 %v137
    %153 = vmatprep.subr.mxu0 0.0
    %154 = vmatpush1.msra.mxu0 0.0
    %155 = vmatprep.subr.mxu0 0.0
    %156 = vmatpush1.msra.mxu0 0.0
    %157 = vmatprep.subr.mxu0 0.0
    %158 = vmatpush1.msra.mxu0 0.0
    %159 = vmatprep.subr.mxu0 0.0
    %160 = vmatpush1.msra.mxu0 0.0
    %161 = vmatprep.subr.mxu0 0.0
    %162 = vmatpush1.msra.mxu0 0.0
    %163 = vmatprep.subr.mxu0 0.0
    %164 = vmatpush1.msra.mxu0 0.0
    %165 = vmatprep.subr.mxu0 0.0
    %166 = vmatpush1.msra.mxu0 0.0
    %167 = vmatprep.subr.mxu0 0.0
    %168 = vmatpush1.msra.mxu0 0.0
    %169 = vmatprep.subr.mxu0 0.0
    %170 = vmatpush1.msra.mxu0 0.0
    %171 = vmatprep.subr.mxu0 0.0
    %172 = vmatpush1.msra.mxu0 0.0
    %173 = vmatprep.subr.mxu0 0.0
    %174 = vmatpush1.msra.mxu0 0.0
    %175 = vmatprep.subr.mxu0 0.0
    %176 = vmatpush1.msra.mxu0 0.0
    %177 = vmatprep.subr.mxu0 0.0
    %178 = vmatpush1.msra.mxu0 0.0
    %179 = vmatprep.subr.mxu0 0.0
    %180 = vmatpush1.msra.mxu0 0.0
    %181 = vmatprep.subr.mxu0 0.0
    %182 = vmatpush1.msra.mxu0 0.0
    %183 = vmatprep.subr.mxu0 0.0
    %184 = vmatpush1.msra.mxu0 0.0
    %185 = vmatprep.subr.mxu0 0.0
    %186 = vmatpush1.msra.mxu0 0.0
    %187 = vmatprep.subr.mxu0 0.0
    %188 = vmatpush1.msra.mxu0 0.0
    %189 = vmatprep.subr.mxu0 0.0
    %190 = vmatpush1.msra.mxu0 0.0
    %191 = vmatprep.subr.mxu0 0.0
    %192 = vmatpush1.msra.mxu0 0.0
    %193 = vmatprep.subr.mxu0 0.0
    %194 = vmatpush1.msra.mxu0 0.0
    %195 = vmatprep.subr.mxu0 0.0
    %196 = vmatpush1.msra.mxu0 0.0
    %197 = vmatprep.subr.mxu0 0.0
    %198 = vmatpush1.msra.mxu0 0.0
    %199 = vmatprep.subr.mxu0 0.0
    %200 = vmatpush1.msra.mxu0 0.0
    %201 = vmatprep.subr.mxu0 0.0
    %202 = vmatpush1.msra.mxu0 0.0
    %203 = vmatprep.subr.mxu0 0.0
    %204 = vmatpush1.msra.mxu0 0.0
    %205 = vmatprep.subr.mxu0 0.0
    %206 = vmatpush1.msra.mxu0 0.0
    %207 = vmatprep.subr.mxu0 0.0
    %208 = vmatpush1.msra.mxu0 0.0
    %209 = vmatprep.mubr.f32.mxu0 0.0
    %210 = vmatmul.mubr.f32.gmra.mrb[0].mxu0 %v140
    %v211 = vpop.f32.mrb[0].mxu0
    %v212 = vadd.f32 0.0, %v211
    %v213 = vpop.f32.mrb[0].mxu0
    %214 = vmatprep.mubr.f32.mxu0 0.0
    %215 = vmatmul.mubr.f32.gmra.mrb[0].mxu0 %v143
    %v216 = vpop.f32.mrb[0].mxu0
    %v217 = vadd.f32 0.0, %v216
    %v218 = vpop.f32.mrb[0].mxu0
    %219 = vdwg.mxu0
    %v220 = vld [vmem:[#allocation10] sm:$0xff]
    %v221 = vld [vmem:[#allocation10 + $0x8] sm:$0xff]
    %v222 = vld [vmem:[#allocation10 + $0x10] sm:$0xff]
    %v223 = vld [vmem:[#allocation10 + $0x18] sm:$0xff]
    %v225 = vsel %vm138, %v130, 0
    %v228 = vsel %vm138, %v131, 0
    %230 = vmatprep.subr.mxu0 0.0
    %231 = vmatpush1.msra.mxu0 %v220
    %232 = vmatprep.subr.mxu0 0.0
    %233 = vmatpush1.msra.mxu0 %v221
    %234 = vmatprep.subr.mxu0 0.0
    %235 = vmatpush1.msra.mxu0 %v222
    %236 = vmatprep.subr.mxu0 0.0
    %237 = vmatpush1.msra.mxu0 %v223
    %238 = vmatprep.subr.mxu0 0.0
    %239 = vmatpush1.msra.mxu0 0.0
    %240 = vmatprep.subr.mxu0 0.0
    %241 = vmatpush1.msra.mxu0 0.0
    %242 = vmatprep.subr.mxu0 0.0
    %243 = vmatpush1.msra.mxu0 0.0
    %244 = vmatprep.subr.mxu0 0.0
    %245 = vmatpush1.msra.mxu0 0.0
    %246 = vmatprep.subr.mxu0 0.0
    %247 = vmatpush1.msra.mxu0 0.0
    %248 = vmatprep.subr.mxu0 0.0
    %249 = vmatpush1.msra.mxu0 0.0
    %250 = vmatprep.subr.mxu0 0.0
    %251 = vmatpush1.msra.mxu0 0.0
    %252 = vmatprep.subr.mxu0 0.0
    %253 = vmatpush1.msra.mxu0 0.0
    %254 = vmatprep.subr.mxu0 0.0
    %255 = vmatpush1.msra.mxu0 0.0
    %256 = vmatprep.subr.mxu0 0.0
    %257 = vmatpush1.msra.mxu0 0.0
    %258 = vmatprep.subr.mxu0 0.0
    %259 = vmatpush1.msra.mxu0 0.0
    %260 = vmatprep.subr.mxu0 0.0
    %261 = vmatpush1.msra.mxu0 0.0
    %262 = vmatprep.subr.mxu0 0.0
    %263 = vmatpush1.msra.mxu0 0.0
    %264 = vmatprep.subr.mxu0 0.0
    %265 = vmatpush1.msra.mxu0 0.0
    %266 = vmatprep.subr.mxu0 0.0
    %267 = vmatpush1.msra.mxu0 0.0
    %268 = vmatprep.subr.mxu0 0.0
    %269 = vmatpush1.msra.mxu0 0.0
    %270 = vmatprep.subr.mxu0 0.0
    %271 = vmatpush1.msra.mxu0 0.0
    %272 = vmatprep.subr.mxu0 0.0
    %273 = vmatpush1.msra.mxu0 0.0
    %274 = vmatprep.subr.mxu0 0.0
    %275 = vmatpush1.msra.mxu0 0.0
    %276 = vmatprep.subr.mxu0 0.0
    %277 = vmatpush1.msra.mxu0 0.0
    %278 = vmatprep.subr.mxu0 0.0
    %279 = vmatpush1.msra.mxu0 0.0
    %280 = vmatprep.subr.mxu0 0.0
    %281 = vmatpush1.msra.mxu0 0.0
    %282 = vmatprep.subr.mxu0 0.0
    %283 = vmatpush1.msra.mxu0 0.0
    %284 = vmatprep.subr.mxu0 0.0
    %285 = vmatpush1.msra.mxu0 0.0
    %286 = vmatprep.subr.mxu0 0.0
    %287 = vmatpush1.msra.mxu0 0.0
    %288 = vmatprep.subr.mxu0 0.0
    %289 = vmatpush1.msra.mxu0 0.0
    %290 = vmatprep.subr.mxu0 0.0
    %291 = vmatpush1.msra.mxu0 0.0
    %292 = vmatprep.subr.mxu0 0.0
    %293 = vmatpush1.msra.mxu0 0.0
    %294 = vmatprep.mubr.f32.mxu0 0.0
    %295 = vmatmul.mubr.f32.gmra.mrb[0].mxu0 %v225
    %v296 = vpop.f32.mrb[0].mxu0
    %v297 = vadd.f32 0.0, %v296
    %v298 = vpop.f32.mrb[0].mxu0
    %299 = vmatprep.mubr.f32.mxu0 0.0
    %300 = vmatmul.mubr.f32.gmra.mrb[0].mxu0 %v228
    %v301 = vpop.f32.mrb[0].mxu0
    %v302 = vadd.f32 0.0, %v301
    %v303 = vpop.f32.mrb[0].mxu0
    %304 = vdwg.mxu0
    %v305 = vld [vmem:[#allocation11] sm:$0xff]
    %v306 = vld [vmem:[#allocation11 + $0x8] sm:$0xff]
    %v307 = vld [vmem:[#allocation11 + $0x10] sm:$0xff]
    %v308 = vld [vmem:[#allocation11 + $0x18] sm:$0xff]
    %v310 = vsel %vm138, %v132, 0
    %v313 = vsel %vm138, %v133, 0
    %315 = vmatprep.subr.mxu0 0.0
    %316 = vmatpush1.msra.mxu0 %v305
    %317 = vmatprep.subr.mxu0 0.0
    %318 = vmatpush1.msra.mxu0 %v306
    %319 = vmatprep.subr.mxu0 0.0
    %320 = vmatpush1.msra.mxu0 %v307
    %321 = vmatprep.subr.mxu0 0.0
    %322 = vmatpush1.msra.mxu0 %v308
    %323 = vmatprep.subr.mxu0 0.0
    %324 = vmatpush1.msra.mxu0 0.0
    %325 = vmatprep.subr.mxu0 0.0
    %326 = vmatpush1.msra.mxu0 0.0
    %327 = vmatprep.subr.mxu0 0.0
    %328 = vmatpush1.msra.mxu0 0.0
    %329 = vmatprep.subr.mxu0 0.0
    %330 = vmatpush1.msra.mxu0 0.0
    %331 = vmatprep.subr.mxu0 0.0
    %332 = vmatpush1.msra.mxu0 0.0
    %333 = vmatprep.subr.mxu0 0.0
    %334 = vmatpush1.msra.mxu0 0.0
    %335 = vmatprep.subr.mxu0 0.0
    %336 = vmatpush1.msra.mxu0 0.0
    %337 = vmatprep.subr.mxu0 0.0
    %338 = vmatpush1.msra.mxu0 0.0
    %339 = vmatprep.subr.mxu0 0.0
    %340 = vmatpush1.msra.mxu0 0.0
    %341 = vmatprep.subr.mxu0 0.0
    %342 = vmatpush1.msra.mxu0 0.0
    %343 = vmatprep.subr.mxu0 0.0
    %344 = vmatpush1.msra.mxu0 0.0
    %345 = vmatprep.subr.mxu0 0.0
    %346 = vmatpush1.msra.mxu0 0.0
    %347 = vmatprep.subr.mxu0 0.0
    %348 = vmatpush1.msra.mxu0 0.0
    %349 = vmatprep.subr.mxu0 0.0
    %350 = vmatpush1.msra.mxu0 0.0
    %351 = vmatprep.subr.mxu0 0.0
    %352 = vmatpush1.msra.mxu0 0.0
    %353 = vmatprep.subr.mxu0 0.0
    %354 = vmatpush1.msra.mxu0 0.0
    %355 = vmatprep.subr.mxu0 0.0
    %356 = vmatpush1.msra.mxu0 0.0
    %357 = vmatprep.subr.mxu0 0.0
    %358 = vmatpush1.msra.mxu0 0.0
    %359 = vmatprep.subr.mxu0 0.0
    %360 = vmatpush1.msra.mxu0 0.0
    %361 = vmatprep.subr.mxu0 0.0
    %362 = vmatpush1.msra.mxu0 0.0
    %363 = vmatprep.subr.mxu0 0.0
    %364 = vmatpush1.msra.mxu0 0.0
    %365 = vmatprep.subr.mxu0 0.0
    %366 = vmatpush1.msra.mxu0 0.0
    %367 = vmatprep.subr.mxu0 0.0
    %368 = vmatpush1.msra.mxu0 0.0
    %369 = vmatprep.subr.mxu0 0.0
    %370 = vmatpush1.msra.mxu0 0.0
    %371 = vmatprep.subr.mxu0 0.0
    %372 = vmatpush1.msra.mxu0 0.0
    %373 = vmatprep.subr.mxu0 0.0
    %374 = vmatpush1.msra.mxu0 0.0
    %375 = vmatprep.subr.mxu0 0.0
    %376 = vmatpush1.msra.mxu0 0.0
    %377 = vmatprep.subr.mxu0 0.0
    %378 = vmatpush1.msra.mxu0 0.0
    %379 = vmatprep.mubr.f32.mxu0 0.0
    %380 = vmatmul.mubr.f32.gmra.mrb[0].mxu0 %v310
    %v381 = vpop.f32.mrb[0].mxu0
    %v382 = vadd.f32 0.0, %v381
    %v383 = vpop.f32.mrb[0].mxu0
    %384 = vmatprep.mubr.f32.mxu0 0.0
    %385 = vmatmul.mubr.f32.gmra.mrb[0].mxu0 %v313
    %v386 = vpop.f32.mrb[0].mxu0
    %v387 = vadd.f32 0.0, %v386
    %v388 = vpop.f32.mrb[0].mxu0
    %389 = vdwg.mxu0
    %v390 = vld [vmem:[%s7] sm:$0x1]
    %v391 = vld [vmem:[%s8] sm:$0x1]
    %vm392 = vcmask 130048
    %v394 = vsel %vm392, %v212, 0
    %v397 = vsel %vm392, %v297, 0
    %399 = vmatprep.subr.mxu0 0.0
    %400 = vmatpush1.xpose.msra.mxu0 %v397
    %401 = vmatprep.subr.mxu0 0.0
    %402 = vmatpush1.xpose.msra.mxu0 0.0
    %403 = vmatprep.subr.mxu0 0.0
    %404 = vmatpush1.xpose.msra.mxu0 0.0
    %405 = vmatprep.subr.mxu0 0.0
    %406 = vmatpush1.xpose.msra.mxu0 0.0
    %407 = vmatprep.subr.mxu0 0.0
    %408 = vmatpush1.xpose.msra.mxu0 0.0
    %409 = vmatprep.subr.mxu0 0.0
    %410 = vmatpush1.xpose.msra.mxu0 0.0
    %411 = vmatprep.subr.mxu0 0.0
    %412 = vmatpush1.xpose.msra.mxu0 0.0
    %413 = vmatprep.subr.mxu0 0.0
    %414 = vmatpush1.xpose.msra.mxu0 0.0
    %415 = vmatprep.subr.mxu0 0.0
    %416 = vmatpush1.xpose.msra.mxu0 0.0
    %417 = vmatprep.subr.mxu0 0.0
    %418 = vmatpush1.xpose.msra.mxu0 0.0
    %419 = vmatprep.subr.mxu0 0.0
    %420 = vmatpush1.xpose.msra.mxu0 0.0
    %421 = vmatprep.subr.mxu0 0.0
    %422 = vmatpush1.xpose.msra.mxu0 0.0
    %423 = vmatprep.subr.mxu0 0.0
    %424 = vmatpush1.xpose.msra.mxu0 0.0
    %425 = vmatprep.subr.mxu0 0.0
    %426 = vmatpush1.xpose.msra.mxu0 0.0
    %427 = vmatprep.subr.mxu0 0.0
    %428 = vmatpush1.xpose.msra.mxu0 0.0
    %429 = vmatprep.subr.mxu0 0.0
    %430 = vmatpush1.xpose.msra.mxu0 0.0
    %431 = vmatprep.subr.mxu0 0.0
    %432 = vmatpush1.xpose.msra.mxu0 0.0
    %433 = vmatprep.subr.mxu0 0.0
    %434 = vmatpush1.xpose.msra.mxu0 0.0
    %435 = vmatprep.subr.mxu0 0.0
    %436 = vmatpush1.xpose.msra.mxu0 0.0
    %437 = vmatprep.subr.mxu0 0.0
    %438 = vmatpush1.xpose.msra.mxu0 0.0
    %439 = vmatprep.subr.mxu0 0.0
    %440 = vmatpush1.xpose.msra.mxu0 0.0
    %441 = vmatprep.subr.mxu0 0.0
    %442 = vmatpush1.xpose.msra.mxu0 0.0
    %443 = vmatprep.subr.mxu0 0.0
    %444 = vmatpush1.xpose.msra.mxu0 0.0
    %445 = vmatprep.subr.mxu0 0.0
    %446 = vmatpush1.xpose.msra.mxu0 0.0
    %447 = vmatprep.subr.mxu0 0.0
    %448 = vmatpush1.xpose.msra.mxu0 0.0
    %449 = vmatprep.subr.mxu0 0.0
    %450 = vmatpush1.xpose.msra.mxu0 0.0
    %451 = vmatprep.subr.mxu0 0.0
    %452 = vmatpush1.xpose.msra.mxu0 0.0
    %453 = vmatprep.subr.mxu0 0.0
    %454 = vmatpush1.xpose.msra.mxu0 0.0
    %455 = vmatprep.subr.mxu0 0.0
    %456 = vmatpush1.xpose.msra.mxu0 0.0
    %457 = vmatprep.subr.mxu0 0.0
    %458 = vmatpush1.xpose.msra.mxu0 0.0
    %459 = vmatprep.subr.mxu0 0.0
    %460 = vmatpush1.xpose.msra.mxu0 0.0
    %461 = vmatprep.subr.mxu0 0.0
    %462 = vmatpush1.xpose.msra.mxu0 0.0
    %463 = vmatprep.mubr.f32.mxu0 0.0
    %464 = vmatmul.mubr.f32.gmra.mrb[0].mxu0 %v394
    %v465 = vpop.f32.mrb[0].mxu0
    %v466 = vadd.f32 0.0, %v465
    %v467 = vpop.f32.mrb[0].mxu0
    %468 = vdwg.mxu0
    %vm469 = vcmask 64512
    %v470 = vsel %vm469, %v466, -inf
    %471 = vmax.xlane.f32.xlu0 %v470
    %v472 = vpop.xlane.xlu0 %471
    %v473 = vsub.f32 %v466, %v472
    %v474 = vmul.f32 %v473, 1.442695
    %v475 = vpow.pop %v474
    %v476 = vsel %vm469, %v475, 0.0
    %477 = vadd.xlane.f32.xlu0 %v476
    %v478 = vpop.xlane.xlu0 %477
    %v480 = vsel %vm469, %v475, 0
    %482 = vmatprep.subr.mxu0 0.0
    %483 = vmatpush1.msra.mxu0 %v382
    %484 = vmatprep.subr.mxu0 0.0
    %485 = vmatpush1.msra.mxu0 0.0
    %486 = vmatprep.subr.mxu0 0.0
    %487 = vmatpush1.msra.mxu0 0.0
    %488 = vmatprep.subr.mxu0 0.0
    %489 = vmatpush1.msra.mxu0 0.0
    %490 = vmatprep.subr.mxu0 0.0
    %491 = vmatpush1.msra.mxu0 0.0
    %492 = vmatprep.subr.mxu0 0.0
    %493 = vmatpush1.msra.mxu0 0.0
    %494 = vmatprep.subr.mxu0 0.0
    %495 = vmatpush1.msra.mxu0 0.0
    %496 = vmatprep.subr.mxu0 0.0
    %497 = vmatpush1.msra.mxu0 0.0
    %498 = vmatprep.subr.mxu0 0.0
    %499 = vmatpush1.msra.mxu0 0.0
    %500 = vmatprep.subr.mxu0 0.0
    %501 = vmatpush1.msra.mxu0 0.0
    %502 = vmatprep.subr.mxu0 0.0
    %503 = vmatpush1.msra.mxu0 0.0
    %504 = vmatprep.subr.mxu0 0.0
    %505 = vmatpush1.msra.mxu0 0.0
    %506 = vmatprep.subr.mxu0 0.0
    %507 = vmatpush1.msra.mxu0 0.0
    %508 = vmatprep.subr.mxu0 0.0
    %509 = vmatpush1.msra.mxu0 0.0
    %510 = vmatprep.subr.mxu0 0.0
    %511 = vmatpush1.msra.mxu0 0.0
    %512 = vmatprep.subr.mxu0 0.0
    %513 = vmatpush1.msra.mxu0 0.0
    %514 = vmatprep.subr.mxu0 0.0
    %515 = vmatpush1.msra.mxu0 0.0
    %516 = vmatprep.subr.mxu0 0.0
    %517 = vmatpush1.msra.mxu0 0.0
    %518 = vmatprep.subr.mxu0 0.0
    %519 = vmatpush1.msra.mxu0 0.0
    %520 = vmatprep.subr.mxu0 0.0
    %521 = vmatpush1.msra.mxu0 0.0
    %522 = vmatprep.subr.mxu0 0.0
    %523 = vmatpush1.msra.mxu0 0.0
    %524 = vmatprep.subr.mxu0 0.0
    %525 = vmatpush1.msra.mxu0 0.0
    %526 = vmatprep.subr.mxu0 0.0
    %527 = vmatpush1.msra.mxu0 0.0
    %528 = vmatprep.subr.mxu0 0.0
    %529 = vmatpush1.msra.mxu0 0.0
    %530 = vmatprep.subr.mxu0 0.0
    %531 = vmatpush1.msra.mxu0 0.0
    %532 = vmatprep.subr.mxu0 0.0
    %533 = vmatpush1.msra.mxu0 0.0
    %534 = vmatprep.subr.mxu0 0.0
    %535 = vmatpush1.msra.mxu0 0.0
    %536 = vmatprep.subr.mxu0 0.0
    %537 = vmatpush1.msra.mxu0 0.0
    %538 = vmatprep.subr.mxu0 0.0
    %539 = vmatpush1.msra.mxu0 0.0
    %540 = vmatprep.subr.mxu0 0.0
    %541 = vmatpush1.msra.mxu0 0.0
    %542 = vmatprep.subr.mxu0 0.0
    %543 = vmatpush1.msra.mxu0 0.0
    %544 = vmatprep.subr.mxu0 0.0
    %545 = vmatpush1.msra.mxu0 0.0
    %546 = vmatprep.mubr.f32.mxu0 0.0
    %547 = vmatmul.mubr.f32.gmra.mrb[0].mxu0 %v480
    %v548 = vpop.f32.mrb[0].mxu0
    %v549 = vadd.f32 0.0, %v548
    %v550 = vpop.f32.mrb[0].mxu0
    %551 = vdwg.mxu0
    %v552 = vrcp.pop %v478
    %v553 = vmul.f32 %v549, %v552
    %v554 = vld [vmem:[#allocation13] sm:$0xff]
    %v555 = vld [vmem:[#allocation13 + $0x8] sm:$0xff]
    %556 = vrot.lane.b32.xlu0 %v212, 112
    %v557 = vpop.permute.xlu0 %556
    %558 = vrot.lane.b32.xlu0 %v297, 112
    %v559 = vpop.permute.xlu0 %558
    %v560 = vsel %vm392, %v557, 0
    %v562 = vsel %vm392, %v559, 0
    %564 = vmatprep.subr.mxu0 0.0
    %565 = vmatpush1.xpose.msra.mxu0 %v562
    %566 = vmatprep.subr.mxu0 0.0
    %567 = vmatpush1.xpose.msra.mxu0 0.0
    %568 = vmatprep.subr.mxu0 0.0
    %569 = vmatpush1.xpose.msra.mxu0 0.0
    %570 = vmatprep.subr.mxu0 0.0
    %571 = vmatpush1.xpose.msra.mxu0 0.0
    %572 = vmatprep.subr.mxu0 0.0
    %573 = vmatpush1.xpose.msra.mxu0 0.0
    %574 = vmatprep.subr.mxu0 0.0
    %575 = vmatpush1.xpose.msra.mxu0 0.0
    %576 = vmatprep.subr.mxu0 0.0
    %577 = vmatpush1.xpose.msra.mxu0 0.0
    %578 = vmatprep.subr.mxu0 0.0
    %579 = vmatpush1.xpose.msra.mxu0 0.0
    %580 = vmatprep.subr.mxu0 0.0
    %581 = vmatpush1.xpose.msra.mxu0 0.0
    %582 = vmatprep.subr.mxu0 0.0
    %583 = vmatpush1.xpose.msra.mxu0 0.0
    %584 = vmatprep.subr.mxu0 0.0
    %585 = vmatpush1.xpose.msra.mxu0 0.0
    %586 = vmatprep.subr.mxu0 0.0
    %587 = vmatpush1.xpose.msra.mxu0 0.0
    %588 = vmatprep.subr.mxu0 0.0
    %589 = vmatpush1.xpose.msra.mxu0 0.0
    %590 = vmatprep.subr.mxu0 0.0
    %591 = vmatpush1.xpose.msra.mxu0 0.0
    %592 = vmatprep.subr.mxu0 0.0
    %593 = vmatpush1.xpose.msra.mxu0 0.0
    %594 = vmatprep.subr.mxu0 0.0
    %595 = vmatpush1.xpose.msra.mxu0 0.0
    %596 = vmatprep.subr.mxu0 0.0
    %597 = vmatpush1.xpose.msra.mxu0 0.0
    %598 = vmatprep.subr.mxu0 0.0
    %599 = vmatpush1.xpose.msra.mxu0 0.0
    %600 = vmatprep.subr.mxu0 0.0
    %601 = vmatpush1.xpose.msra.mxu0 0.0
    %602 = vmatprep.subr.mxu0 0.0
    %603 = vmatpush1.xpose.msra.mxu0 0.0
    %604 = vmatprep.subr.mxu0 0.0
    %605 = vmatpush1.xpose.msra.mxu0 0.0
    %606 = vmatprep.subr.mxu0 0.0
    %607 = vmatpush1.xpose.msra.mxu0 0.0
    %608 = vmatprep.subr.mxu0 0.0
    %609 = vmatpush1.xpose.msra.mxu0 0.0
    %610 = vmatprep.subr.mxu0 0.0
    %611 = vmatpush1.xpose.msra.mxu0 0.0
    %612 = vmatprep.subr.mxu0 0.0
    %613 = vmatpush1.xpose.msra.mxu0 0.0
    %614 = vmatprep.subr.mxu0 0.0
    %615 = vmatpush1.xpose.msra.mxu0 0.0
    %616 = vmatprep.subr.mxu0 0.0
    %617 = vmatpush1.xpose.msra.mxu0 0.0
    %618 = vmatprep.subr.mxu0 0.0
    %619 = vmatpush1.xpose.msra.mxu0 0.0
    %620 = vmatprep.subr.mxu0 0.0
    %621 = vmatpush1.xpose.msra.mxu0 0.0
    %622 = vmatprep.subr.mxu0 0.0
    %623 = vmatpush1.xpose.msra.mxu0 0.0
    %624 = vmatprep.subr.mxu0 0.0
    %625 = vmatpush1.xpose.msra.mxu0 0.0
    %626 = vmatprep.subr.mxu0 0.0
    %627 = vmatpush1.xpose.msra.mxu0 0.0
    %628 = vmatprep.mubr.f32.mxu0 0.0
    %629 = vmatmul.mubr.f32.gmra.mrb[0].mxu0 %v560
    %v630 = vpop.f32.mrb[0].mxu0
    %v631 = vadd.f32 0.0, %v630
    %v632 = vpop.f32.mrb[0].mxu0
    %633 = vdwg.mxu0
    %v634 = vsel %vm469, %v631, -inf
    %635 = vmax.xlane.f32.xlu0 %v634
    %v636 = vpop.xlane.xlu0 %635
    %v637 = vsub.f32 %v631, %v636
    %v638 = vmul.f32 %v637, 1.442695
    %v639 = vpow.pop %v638
    %v640 = vsel %vm469, %v639, 0.0
    %641 = vadd.xlane.f32.xlu0 %v640
    %v642 = vpop.xlane.xlu0 %641
    %644 = vrot.lane.b32.xlu0 %v382, 112
    %v645 = vpop.permute.xlu0 %644
    %v648 = vsel %vm469, %v639, 0
    %650 = vmatprep.subr.mxu0 0.0
    %651 = vmatpush1.msra.mxu0 %v645
    %652 = vmatprep.subr.mxu0 0.0
    %653 = vmatpush1.msra.mxu0 0.0
    %654 = vmatprep.subr.mxu0 0.0
    %655 = vmatpush1.msra.mxu0 0.0
    %656 = vmatprep.subr.mxu0 0.0
    %657 = vmatpush1.msra.mxu0 0.0
    %658 = vmatprep.subr.mxu0 0.0
    %659 = vmatpush1.msra.mxu0 0.0
    %660 = vmatprep.subr.mxu0 0.0
    %661 = vmatpush1.msra.mxu0 0.0
    %662 = vmatprep.subr.mxu0 0.0
    %663 = vmatpush1.msra.mxu0 0.0
    %664 = vmatprep.subr.mxu0 0.0
    %665 = vmatpush1.msra.mxu0 0.0
    %666 = vmatprep.subr.mxu0 0.0
    %667 = vmatpush1.msra.mxu0 0.0
    %668 = vmatprep.subr.mxu0 0.0
    %669 = vmatpush1.msra.mxu0 0.0
    %670 = vmatprep.subr.mxu0 0.0
    %671 = vmatpush1.msra.mxu0 0.0
    %672 = vmatprep.subr.mxu0 0.0
    %673 = vmatpush1.msra.mxu0 0.0
    %674 = vmatprep.subr.mxu0 0.0
    %675 = vmatpush1.msra.mxu0 0.0
    %676 = vmatprep.subr.mxu0 0.0
    %677 = vmatpush1.msra.mxu0 0.0
    %678 = vmatprep.subr.mxu0 0.0
    %679 = vmatpush1.msra.mxu0 0.0
    %680 = vmatprep.subr.mxu0 0.0
    %681 = vmatpush1.msra.mxu0 0.0
    %682 = vmatprep.subr.mxu0 0.0
    %683 = vmatpush1.msra.mxu0 0.0
    %684 = vmatprep.subr.mxu0 0.0
    %685 = vmatpush1.msra.mxu0 0.0
    %686 = vmatprep.subr.mxu0 0.0
    %687 = vmatpush1.msra.mxu0 0.0
    %688 = vmatprep.subr.mxu0 0.0
    %689 = vmatpush1.msra.mxu0 0.0
    %690 = vmatprep.subr.mxu0 0.0
    %691 = vmatpush1.msra.mxu0 0.0
    %692 = vmatprep.subr.mxu0 0.0
    %693 = vmatpush1.msra.mxu0 0.0
    %694 = vmatprep.subr.mxu0 0.0
    %695 = vmatpush1.msra.mxu0 0.0
    %696 = vmatprep.subr.mxu0 0.0
    %697 = vmatpush1.msra.mxu0 0.0
    %698 = vmatprep.subr.mxu0 0.0
    %699 = vmatpush1.msra.mxu0 0.0
    %700 = vmatprep.subr.mxu0 0.0
    %701 = vmatpush1.msra.mxu0 0.0
    %702 = vmatprep.subr.mxu0 0.0
    %703 = vmatpush1.msra.mxu0 0.0
    %704 = vmatprep.subr.mxu0 0.0
    %705 = vmatpush1.msra.mxu0 0.0
    %706 = vmatprep.subr.mxu0 0.0
    %707 = vmatpush1.msra.mxu0 0.0
    %708 = vmatprep.subr.mxu0 0.0
    %709 = vmatpush1.msra.mxu0 0.0
    %710 = vmatprep.subr.mxu0 0.0
    %711 = vmatpush1.msra.mxu0 0.0
    %712 = vmatprep.subr.mxu0 0.0
    %713 = vmatpush1.msra.mxu0 0.0
    %714 = vmatprep.mubr.f32.mxu0 0.0
    %715 = vmatmul.mubr.f32.gmra.mrb[0].mxu0 %v648
    %v716 = vpop.f32.mrb[0].mxu0
    %v717 = vadd.f32 0.0, %v716
    %v718 = vpop.f32.mrb[0].mxu0
    %719 = vdwg.mxu0
    %v720 = vrcp.pop %v642
    %v721 = vmul.f32 %v717, %v720
    %v722 = vld [vmem:[#allocation13 + $0x10] sm:$0xff]
    %v723 = vld [vmem:[#allocation13 + $0x18] sm:$0xff]
    %v725 = vsel %vm392, %v721, 0
    %727 = vmatprep.subr.mxu0 0.0
    %728 = vmatpush1.msra.mxu0 %v722
    %729 = vmatprep.subr.mxu0 0.0
    %730 = vmatpush1.msra.mxu0 %v723
    %731 = vmatprep.subr.mxu0 0.0
    %732 = vmatpush1.msra.mxu0 0.0
    %733 = vmatprep.subr.mxu0 0.0
    %734 = vmatpush1.msra.mxu0 0.0
    %735 = vmatprep.subr.mxu0 0.0
    %736 = vmatpush1.msra.mxu0 0.0
    %737 = vmatprep.subr.mxu0 0.0
    %738 = vmatpush1.msra.mxu0 0.0
    %739 = vmatprep.subr.mxu0 0.0
    %740 = vmatpush1.msra.mxu0 0.0
    %741 = vmatprep.subr.mxu0 0.0
    %742 = vmatpush1.msra.mxu0 0.0
    %743 = vmatprep.subr.mxu0 0.0
    %744 = vmatpush1.msra.mxu0 0.0
    %745 = vmatprep.subr.mxu0 0.0
    %746 = vmatpush1.msra.mxu0 0.0
    %747 = vmatprep.subr.mxu0 0.0
    %748 = vmatpush1.msra.mxu0 0.0
    %749 = vmatprep.subr.mxu0 0.0
    %750 = vmatpush1.msra.mxu0 0.0
    %751 = vmatprep.subr.mxu0 0.0
    %752 = vmatpush1.msra.mxu0 0.0
    %753 = vmatprep.subr.mxu0 0.0
    %754 = vmatpush1.msra.mxu0 0.0
    %755 = vmatprep.subr.mxu0 0.0
    %756 = vmatpush1.msra.mxu0 0.0
    %757 = vmatprep.subr.mxu0 0.0
    %758 = vmatpush1.msra.mxu0 0.0
    %759 = vmatprep.subr.mxu0 0.0
    %760 = vmatpush1.msra.mxu0 0.0
    %761 = vmatprep.subr.mxu0 0.0
    %762 = vmatpush1.msra.mxu0 0.0
    %763 = vmatprep.subr.mxu0 0.0
    %764 = vmatpush1.msra.mxu0 0.0
    %765 = vmatprep.subr.mxu0 0.0
    %766 = vmatpush1.msra.mxu0 0.0
    %767 = vmatprep.subr.mxu0 0.0
    %768 = vmatpush1.msra.mxu0 0.0
    %769 = vmatprep.subr.mxu0 0.0
    %770 = vmatpush1.msra.mxu0 0.0
    %771 = vmatprep.subr.mxu0 0.0
    %772 = vmatpush1.msra.mxu0 0.0
    %773 = vmatprep.subr.mxu0 0.0
    %774 = vmatpush1.msra.mxu0 0.0
    %775 = vmatprep.subr.mxu0 0.0
    %776 = vmatpush1.msra.mxu0 0.0
    %777 = vmatprep.subr.mxu0 0.0
    %778 = vmatpush1.msra.mxu0 0.0
    %779 = vmatprep.subr.mxu0 0.0
    %780 = vmatpush1.msra.mxu0 0.0
    %781 = vmatprep.subr.mxu0 0.0
    %782 = vmatpush1.msra.mxu0 0.0
    %783 = vmatprep.subr.mxu0 0.0
    %784 = vmatpush1.msra.mxu0 0.0
    %785 = vmatprep.subr.mxu0 0.0
    %786 = vmatpush1.msra.mxu0 0.0
    %787 = vmatprep.subr.mxu0 0.0
    %788 = vmatpush1.msra.mxu0 0.0
    %789 = vmatprep.subr.mxu0 0.0
    %790 = vmatpush1.msra.mxu0 0.0
    %791 = vmatprep.mubr.f32.mxu0 0.0
    %792 = vmatmul.mubr.f32.gmra.mrb[0].mxu0 %v725
    %v793 = vpop.f32.mrb[0].mxu0
    %v794 = vadd.f32 0.0, %v793
    %v795 = vpop.f32.mrb[0].mxu0
    %796 = vdwg.mxu0
    %v798 = vsel %vm392, %v553, 0
    %800 = vmatprep.subr.mxu0 0.0
    %801 = vmatpush1.msra.mxu0 %v554
    %802 = vmatprep.subr.mxu0 0.0
    %803 = vmatpush1.msra.mxu0 %v555
    %804 = vmatprep.subr.mxu0 0.0
    %805 = vmatpush1.msra.mxu0 0.0
    %806 = vmatprep.subr.mxu0 0.0
    %807 = vmatpush1.msra.mxu0 0.0
    %808 = vmatprep.subr.mxu0 0.0
    %809 = vmatpush1.msra.mxu0 0.0
    %810 = vmatprep.subr.mxu0 0.0
    %811 = vmatpush1.msra.mxu0 0.0
    %812 = vmatprep.subr.mxu0 0.0
    %813 = vmatpush1.msra.mxu0 0.0
    %814 = vmatprep.subr.mxu0 0.0
    %815 = vmatpush1.msra.mxu0 0.0
    %816 = vmatprep.subr.mxu0 0.0
    %817 = vmatpush1.msra.mxu0 0.0
    %818 = vmatprep.subr.mxu0 0.0
    %819 = vmatpush1.msra.mxu0 0.0
    %820 = vmatprep.subr.mxu0 0.0
    %821 = vmatpush1.msra.mxu0 0.0
    %822 = vmatprep.subr.mxu0 0.0
    %823 = vmatpush1.msra.mxu0 0.0
    %824 = vmatprep.subr.mxu0 0.0
    %825 = vmatpush1.msra.mxu0 0.0
    %826 = vmatprep.subr.mxu0 0.0
    %827 = vmatpush1.msra.mxu0 0.0
    %828 = vmatprep.subr.mxu0 0.0
    %829 = vmatpush1.msra.mxu0 0.0
    %830 = vmatprep.subr.mxu0 0.0
    %831 = vmatpush1.msra.mxu0 0.0
    %832 = vmatprep.subr.mxu0 0.0
    %833 = vmatpush1.msra.mxu0 0.0
    %834 = vmatprep.subr.mxu0 0.0
    %835 = vmatpush1.msra.mxu0 0.0
    %836 = vmatprep.subr.mxu0 0.0
    %837 = vmatpush1.msra.mxu0 0.0
    %838 = vmatprep.subr.mxu0 0.0
    %839 = vmatpush1.msra.mxu0 0.0
    %840 = vmatprep.subr.mxu0 0.0
    %841 = vmatpush1.msra.mxu0 0.0
    %842 = vmatprep.subr.mxu0 0.0
    %843 = vmatpush1.msra.mxu0 0.0
    %844 = vmatprep.subr.mxu0 0.0
    %845 = vmatpush1.msra.mxu0 0.0
    %846 = vmatprep.subr.mxu0 0.0
    %847 = vmatpush1.msra.mxu0 0.0
    %848 = vmatprep.subr.mxu0 0.0
    %849 = vmatpush1.msra.mxu0 0.0
    %850 = vmatprep.subr.mxu0 0.0
    %851 = vmatpush1.msra.mxu0 0.0
    %852 = vmatprep.subr.mxu0 0.0
    %853 = vmatpush1.msra.mxu0 0.0
    %854 = vmatprep.subr.mxu0 0.0
    %855 = vmatpush1.msra.mxu0 0.0
    %856 = vmatprep.subr.mxu0 0.0
    %857 = vmatpush1.msra.mxu0 0.0
    %858 = vmatprep.subr.mxu0 0.0
    %859 = vmatpush1.msra.mxu0 0.0
    %860 = vmatprep.subr.mxu0 0.0
    %861 = vmatpush1.msra.mxu0 0.0
    %862 = vmatprep.subr.mxu0 0.0
    %863 = vmatpush1.msra.mxu0 0.0
    %864 = vmatprep.mubr.f32.mxu0 0.0
    %865 = vmatmul.mubr.f32.gmra.mrb[0].mxu0 %v798
    %v866 = vpop.f32.mrb[0].mxu0
    %v867 = vadd.f32 %v794, %v866
    %v868 = vpop.f32.mrb[0].mxu0
    %869 = vdwg.mxu0
    %v870 = vadd.f32 %v867, %v128
    %v871 = vsel %vm138, %v870, 0.0
    %872 = vadd.xlane.f32.xlu0 %v871
    %v873 = vpop.xlane.xlu0 %872
    %v874 = vrcp.pop 32.0
    %v875 = vmul.f32 %v873, %v874
    %v876 = vsub.f32 %v870, %v875
    %v877 = vmul.f32 %v876, %v876
    %v878 = vsel %vm138, %v877, 0.0
    %879 = vadd.xlane.f32.xlu0 %v878
    %v880 = vpop.xlane.xlu0 %879
    %v881 = vrcp.pop 31.0
    %v882 = vmul.f32 %v880, %v881
    %v883 = vrsqrt.pop %v882
    %v884 = vmul.f32 %v882, %v883
    %vm885 = vcmp.eq.f32.partialorder %v882, inf
    %v886 = vsel %vm885, %v882, %v884
    %vm887 = vcmp.eq.f32.partialorder %v882, 0.0
    %v888 = vand.u32 %v882, 2147483648
    %v889 = vsel %vm887, %v888, %v886
    %v890 = vadd.f32 %v889, 1e-09
    %v891 = vrcp.pop %v890
    %v893 = vlaneseq
    %v894 = vshrl.u32 %v893, 7
    %v895 = vsub.s32 0, %v894
    %v896 = vrot.slane %v390, %v895
    %v898 = vmul.f32 %v896, %v876
    %v899 = vmul.f32 %v898, %v891
    %v901 = vlaneseq
    %v902 = vshrl.u32 %v901, 7
    %v903 = vsub.s32 0, %v902
    %v904 = vrot.slane %v391, %v903
    %v906 = vadd.f32 %v899, %v904
    %907 = vst.msk [vmem:[#allocation14] sm:$0xff] %vm138, %v906
    %v909 = vsel %vm392, %v217, 0
    %v912 = vsel %vm392, %v302, 0
    %914 = vmatprep.subr.mxu0 0.0
    %915 = vmatpush1.xpose.msra.mxu0 %v912
    %916 = vmatprep.subr.mxu0 0.0
    %917 = vmatpush1.xpose.msra.mxu0 0.0
    %918 = vmatprep.subr.mxu0 0.0
    %919 = vmatpush1.xpose.msra.mxu0 0.0
    %920 = vmatprep.subr.mxu0 0.0
    %921 = vmatpush1.xpose.msra.mxu0 0.0
    %922 = vmatprep.subr.mxu0 0.0
    %923 = vmatpush1.xpose.msra.mxu0 0.0
    %924 = vmatprep.subr.mxu0 0.0
    %925 = vmatpush1.xpose.msra.mxu0 0.0
    %926 = vmatprep.subr.mxu0 0.0
    %927 = vmatpush1.xpose.msra.mxu0 0.0
    %928 = vmatprep.subr.mxu0 0.0
    %929 = vmatpush1.xpose.msra.mxu0 0.0
    %930 = vmatprep.subr.mxu0 0.0
    %931 = vmatpush1.xpose.msra.mxu0 0.0
    %932 = vmatprep.subr.mxu0 0.0
    %933 = vmatpush1.xpose.msra.mxu0 0.0
    %934 = vmatprep.subr.mxu0 0.0
    %935 = vmatpush1.xpose.msra.mxu0 0.0
    %936 = vmatprep.subr.mxu0 0.0
    %937 = vmatpush1.xpose.msra.mxu0 0.0
    %938 = vmatprep.subr.mxu0 0.0
    %939 = vmatpush1.xpose.msra.mxu0 0.0
    %940 = vmatprep.subr.mxu0 0.0
    %941 = vmatpush1.xpose.msra.mxu0 0.0
    %942 = vmatprep.subr.mxu0 0.0
    %943 = vmatpush1.xpose.msra.mxu0 0.0
    %944 = vmatprep.subr.mxu0 0.0
    %945 = vmatpush1.xpose.msra.mxu0 0.0
    %946 = vmatprep.subr.mxu0 0.0
    %947 = vmatpush1.xpose.msra.mxu0 0.0
    %948 = vmatprep.subr.mxu0 0.0
    %949 = vmatpush1.xpose.msra.mxu0 0.0
    %950 = vmatprep.subr.mxu0 0.0
    %951 = vmatpush1.xpose.msra.mxu0 0.0
    %952 = vmatprep.subr.mxu0 0.0
    %953 = vmatpush1.xpose.msra.mxu0 0.0
    %954 = vmatprep.subr.mxu0 0.0
    %955 = vmatpush1.xpose.msra.mxu0 0.0
    %956 = vmatprep.subr.mxu0 0.0
    %957 = vmatpush1.xpose.msra.mxu0 0.0
    %958 = vmatprep.subr.mxu0 0.0
    %959 = vmatpush1.xpose.msra.mxu0 0.0
    %960 = vmatprep.subr.mxu0 0.0
    %961 = vmatpush1.xpose.msra.mxu0 0.0
    %962 = vmatprep.subr.mxu0 0.0
    %963 = vmatpush1.xpose.msra.mxu0 0.0
    %964 = vmatprep.subr.mxu0 0.0
    %965 = vmatpush1.xpose.msra.mxu0 0.0
    %966 = vmatprep.subr.mxu0 0.0
    %967 = vmatpush1.xpose.msra.mxu0 0.0
    %968 = vmatprep.subr.mxu0 0.0
    %969 = vmatpush1.xpose.msra.mxu0 0.0
    %970 = vmatprep.subr.mxu0 0.0
    %971 = vmatpush1.xpose.msra.mxu0 0.0
    %972 = vmatprep.subr.mxu0 0.0
    %973 = vmatpush1.xpose.msra.mxu0 0.0
    %974 = vmatprep.subr.mxu0 0.0
    %975 = vmatpush1.xpose.msra.mxu0 0.0
    %976 = vmatprep.subr.mxu0 0.0
    %977 = vmatpush1.xpose.msra.mxu0 0.0
    %978 = vmatprep.mubr.f32.mxu0 0.0
    %979 = vmatmul.mubr.f32.gmra.mrb[0].mxu0 %v909
    %v980 = vpop.f32.mrb[0].mxu0
    %v981 = vadd.f32 0.0, %v980
    %v982 = vpop.f32.mrb[0].mxu0
    %983 = vdwg.mxu0
    %v984 = vsel %vm469, %v981, -inf
    %985 = vmax.xlane.f32.xlu0 %v984
    %v986 = vpop.xlane.xlu0 %985
    %v987 = vsub.f32 %v981, %v986
    %v988 = vmul.f32 %v987, 1.442695
    %v989 = vpow.pop %v988
    %v990 = vsel %vm469, %v989, 0.0
    %991 = vadd.xlane.f32.xlu0 %v990
    %v992 = vpop.xlane.xlu0 %991
    %v994 = vsel %vm469, %v989, 0
    %996 = vmatprep.subr.mxu0 0.0
    %997 = vmatpush1.msra.mxu0 %v387
    %998 = vmatprep.subr.mxu0 0.0
    %999 = vmatpush1.msra.mxu0 0.0
    %1000 = vmatprep.subr.mxu0 0.0
    %1001 = vmatpush1.msra.mxu0 0.0
    %1002 = vmatprep.subr.mxu0 0.0
    %1003 = vmatpush1.msra.mxu0 0.0
    %1004 = vmatprep.subr.mxu0 0.0
    %1005 = vmatpush1.msra.mxu0 0.0
    %1006 = vmatprep.subr.mxu0 0.0
    %1007 = vmatpush1.msra.mxu0 0.0
    %1008 = vmatprep.subr.mxu0 0.0
    %1009 = vmatpush1.msra.mxu0 0.0
    %1010 = vmatprep.subr.mxu0 0.0
    %1011 = vmatpush1.msra.mxu0 0.0
    %1012 = vmatprep.subr.mxu0 0.0
    %1013 = vmatpush1.msra.mxu0 0.0
    %1014 = vmatprep.subr.mxu0 0.0
    %1015 = vmatpush1.msra.mxu0 0.0
    %1016 = vmatprep.subr.mxu0 0.0
    %1017 = vmatpush1.msra.mxu0 0.0
    %1018 = vmatprep.subr.mxu0 0.0
    %1019 = vmatpush1.msra.mxu0 0.0
    %1020 = vmatprep.subr.mxu0 0.0
    %1021 = vmatpush1.msra.mxu0 0.0
    %1022 = vmatprep.subr.mxu0 0.0
    %1023 = vmatpush1.msra.mxu0 0.0
    %1024 = vmatprep.subr.mxu0 0.0
    %1025 = vmatpush1.msra.mxu0 0.0
    %1026 = vmatprep.subr.mxu0 0.0
    %1027 = vmatpush1.msra.mxu0 0.0
    %1028 = vmatprep.subr.mxu0 0.0
    %1029 = vmatpush1.msra.mxu0 0.0
    %1030 = vmatprep.subr.mxu0 0.0
    %1031 = vmatpush1.msra.mxu0 0.0
    %1032 = vmatprep.subr.mxu0 0.0
    %1033 = vmatpush1.msra.mxu0 0.0
    %1034 = vmatprep.subr.mxu0 0.0
    %1035 = vmatpush1.msra.mxu0 0.0
    %1036 = vmatprep.subr.mxu0 0.0
    %1037 = vmatpush1.msra.mxu0 0.0
    %1038 = vmatprep.subr.mxu0 0.0
    %1039 = vmatpush1.msra.mxu0 0.0
    %1040 = vmatprep.subr.mxu0 0.0
    %1041 = vmatpush1.msra.mxu0 0.0
    %1042 = vmatprep.subr.mxu0 0.0
    %1043 = vmatpush1.msra.mxu0 0.0
    %1044 = vmatprep.subr.mxu0 0.0
    %1045 = vmatpush1.msra.mxu0 0.0
    %1046 = vmatprep.subr.mxu0 0.0
    %1047 = vmatpush1.msra.mxu0 0.0
    %1048 = vmatprep.subr.mxu0 0.0
    %1049 = vmatpush1.msra.mxu0 0.0
    %1050 = vmatprep.subr.mxu0 0.0
    %1051 = vmatpush1.msra.mxu0 0.0
    %1052 = vmatprep.subr.mxu0 0.0
    %1053 = vmatpush1.msra.mxu0 0.0
    %1054 = vmatprep.subr.mxu0 0.0
    %1055 = vmatpush1.msra.mxu0 0.0
    %1056 = vmatprep.subr.mxu0 0.0
    %1057 = vmatpush1.msra.mxu0 0.0
    %1058 = vmatprep.subr.mxu0 0.0
    %1059 = vmatpush1.msra.mxu0 0.0
    %1060 = vmatprep.mubr.f32.mxu0 0.0
    %1061 = vmatmul.mubr.f32.gmra.mrb[0].mxu0 %v994
    %v1062 = vpop.f32.mrb[0].mxu0
    %v1063 = vadd.f32 0.0, %v1062
    %v1064 = vpop.f32.mrb[0].mxu0
    %1065 = vdwg.mxu0
    %v1066 = vrcp.pop %v992
    %v1067 = vmul.f32 %v1063, %v1066
    %v1068 = vld [vmem:[#allocation13] sm:$0xff]
    %v1069 = vld [vmem:[#allocation13 + $0x8] sm:$0xff]
    %1070 = vrot.lane.b32.xlu0 %v217, 112
    %v1071 = vpop.permute.xlu0 %1070
    %1072 = vrot.lane.b32.xlu0 %v302, 112
    %v1073 = vpop.permute.xlu0 %1072
    %v1074 = vsel %vm392, %v1071, 0
    %v1076 = vsel %vm392, %v1073, 0
    %1078 = vmatprep.subr.mxu0 0.0
    %1079 = vmatpush1.xpose.msra.mxu0 %v1076
    %1080 = vmatprep.subr.mxu0 0.0
    %1081 = vmatpush1.xpose.msra.mxu0 0.0
    %1082 = vmatprep.subr.mxu0 0.0
    %1083 = vmatpush1.xpose.msra.mxu0 0.0
    %1084 = vmatprep.subr.mxu0 0.0
    %1085 = vmatpush1.xpose.msra.mxu0 0.0
    %1086 = vmatprep.subr.mxu0 0.0
    %1087 = vmatpush1.xpose.msra.mxu0 0.0
    %1088 = vmatprep.subr.mxu0 0.0
    %1089 = vmatpush1.xpose.msra.mxu0 0.0
    %1090 = vmatprep.subr.mxu0 0.0
    %1091 = vmatpush1.xpose.msra.mxu0 0.0
    %1092 = vmatprep.subr.mxu0 0.0
    %1093 = vmatpush1.xpose.msra.mxu0 0.0
    %1094 = vmatprep.subr.mxu0 0.0
    %1095 = vmatpush1.xpose.msra.mxu0 0.0
    %1096 = vmatprep.subr.mxu0 0.0
    %1097 = vmatpush1.xpose.msra.mxu0 0.0
    %1098 = vmatprep.subr.mxu0 0.0
    %1099 = vmatpush1.xpose.msra.mxu0 0.0
    %1100 = vmatprep.subr.mxu0 0.0
    %1101 = vmatpush1.xpose.msra.mxu0 0.0
    %1102 = vmatprep.subr.mxu0 0.0
    %1103 = vmatpush1.xpose.msra.mxu0 0.0
    %1104 = vmatprep.subr.mxu0 0.0
    %1105 = vmatpush1.xpose.msra.mxu0 0.0
    %1106 = vmatprep.subr.mxu0 0.0
    %1107 = vmatpush1.xpose.msra.mxu0 0.0
    %1108 = vmatprep.subr.mxu0 0.0
    %1109 = vmatpush1.xpose.msra.mxu0 0.0
    %1110 = vmatprep.subr.mxu0 0.0
    %1111 = vmatpush1.xpose.msra.mxu0 0.0
    %1112 = vmatprep.subr.mxu0 0.0
    %1113 = vmatpush1.xpose.msra.mxu0 0.0
    %1114 = vmatprep.subr.mxu0 0.0
    %1115 = vmatpush1.xpose.msra.mxu0 0.0
    %1116 = vmatprep.subr.mxu0 0.0
    %1117 = vmatpush1.xpose.msra.mxu0 0.0
    %1118 = vmatprep.subr.mxu0 0.0
    %1119 = vmatpush1.xpose.msra.mxu0 0.0
    %1120 = vmatprep.subr.mxu0 0.0
    %1121 = vmatpush1.xpose.msra.mxu0 0.0
    %1122 = vmatprep.subr.mxu0 0.0
    %1123 = vmatpush1.xpose.msra.mxu0 0.0
    %1124 = vmatprep.subr.mxu0 0.0
    %1125 = vmatpush1.xpose.msra.mxu0 0.0
    %1126 = vmatprep.subr.mxu0 0.0
    %1127 = vmatpush1.xpose.msra.mxu0 0.0
    %1128 = vmatprep.subr.mxu0 0.0
    %1129 = vmatpush1.xpose.msra.mxu0 0.0
    %1130 = vmatprep.subr.mxu0 0.0
    %1131 = vmatpush1.xpose.msra.mxu0 0.0
    %1132 = vmatprep.subr.mxu0 0.0
    %1133 = vmatpush1.xpose.msra.mxu0 0.0
    %1134 = vmatprep.subr.mxu0 0.0
    %1135 = vmatpush1.xpose.msra.mxu0 0.0
    %1136 = vmatprep.subr.mxu0 0.0
    %1137 = vmatpush1.xpose.msra.mxu0 0.0
    %1138 = vmatprep.subr.mxu0 0.0
    %1139 = vmatpush1.xpose.msra.mxu0 0.0
    %1140 = vmatprep.subr.mxu0 0.0
    %1141 = vmatpush1.xpose.msra.mxu0 0.0
    %1142 = vmatprep.mubr.f32.mxu0 0.0
    %1143 = vmatmul.mubr.f32.gmra.mrb[0].mxu0 %v1074
    %v1144 = vpop.f32.mrb[0].mxu0
    %v1145 = vadd.f32 0.0, %v1144
    %v1146 = vpop.f32.mrb[0].mxu0
    %1147 = vdwg.mxu0
    %v1148 = vsel %vm469, %v1145, -inf
    %1149 = vmax.xlane.f32.xlu0 %v1148
    %v1150 = vpop.xlane.xlu0 %1149
    %v1151 = vsub.f32 %v1145, %v1150
    %v1152 = vmul.f32 %v1151, 1.442695
    %v1153 = vpow.pop %v1152
    %v1154 = vsel %vm469, %v1153, 0.0
    %1155 = vadd.xlane.f32.xlu0 %v1154
    %v1156 = vpop.xlane.xlu0 %1155
    %1158 = vrot.lane.b32.xlu0 %v387, 112
    %v1159 = vpop.permute.xlu0 %1158
    %v1162 = vsel %vm469, %v1153, 0
    %1164 = vmatprep.subr.mxu0 0.0
    %1165 = vmatpush1.msra.mxu0 %v1159
    %1166 = vmatprep.subr.mxu0 0.0
    %1167 = vmatpush1.msra.mxu0 0.0
    %1168 = vmatprep.subr.mxu0 0.0
    %1169 = vmatpush1.msra.mxu0 0.0
    %1170 = vmatprep.subr.mxu0 0.0
    %1171 = vmatpush1.msra.mxu0 0.0
    %1172 = vmatprep.subr.mxu0 0.0
    %1173 = vmatpush1.msra.mxu0 0.0
    %1174 = vmatprep.subr.mxu0 0.0
    %1175 = vmatpush1.msra.mxu0 0.0
    %1176 = vmatprep.subr.mxu0 0.0
    %1177 = vmatpush1.msra.mxu0 0.0
    %1178 = vmatprep.subr.mxu0 0.0
    %1179 = vmatpush1.msra.mxu0 0.0
    %1180 = vmatprep.subr.mxu0 0.0
    %1181 = vmatpush1.msra.mxu0 0.0
    %1182 = vmatprep.subr.mxu0 0.0
    %1183 = vmatpush1.msra.mxu0 0.0
    %1184 = vmatprep.subr.mxu0 0.0
    %1185 = vmatpush1.msra.mxu0 0.0
    %1186 = vmatprep.subr.mxu0 0.0
    %1187 = vmatpush1.msra.mxu0 0.0
    %1188 = vmatprep.subr.mxu0 0.0
    %1189 = vmatpush1.msra.mxu0 0.0
    %1190 = vmatprep.subr.mxu0 0.0
    %1191 = vmatpush1.msra.mxu0 0.0
    %1192 = vmatprep.subr.mxu0 0.0
    %1193 = vmatpush1.msra.mxu0 0.0
    %1194 = vmatprep.subr.mxu0 0.0
    %1195 = vmatpush1.msra.mxu0 0.0
    %1196 = vmatprep.subr.mxu0 0.0
    %1197 = vmatpush1.msra.mxu0 0.0
    %1198 = vmatprep.subr.mxu0 0.0
    %1199 = vmatpush1.msra.mxu0 0.0
    %1200 = vmatprep.subr.mxu0 0.0
    %1201 = vmatpush1.msra.mxu0 0.0
    %1202 = vmatprep.subr.mxu0 0.0
    %1203 = vmatpush1.msra.mxu0 0.0
    %1204 = vmatprep.subr.mxu0 0.0
    %1205 = vmatpush1.msra.mxu0 0.0
    %1206 = vmatprep.subr.mxu0 0.0
    %1207 = vmatpush1.msra.mxu0 0.0
    %1208 = vmatprep.subr.mxu0 0.0
    %1209 = vmatpush1.msra.mxu0 0.0
    %1210 = vmatprep.subr.mxu0 0.0
    %1211 = vmatpush1.msra.mxu0 0.0
    %1212 = vmatprep.subr.mxu0 0.0
    %1213 = vmatpush1.msra.mxu0 0.0
    %1214 = vmatprep.subr.mxu0 0.0
    %1215 = vmatpush1.msra.mxu0 0.0
    %1216 = vmatprep.subr.mxu0 0.0
    %1217 = vmatpush1.msra.mxu0 0.0
    %1218 = vmatprep.subr.mxu0 0.0
    %1219 = vmatpush1.msra.mxu0 0.0
    %1220 = vmatprep.subr.mxu0 0.0
    %1221 = vmatpush1.msra.mxu0 0.0
    %1222 = vmatprep.subr.mxu0 0.0
    %1223 = vmatpush1.msra.mxu0 0.0
    %1224 = vmatprep.subr.mxu0 0.0
    %1225 = vmatpush1.msra.mxu0 0.0
    %1226 = vmatprep.subr.mxu0 0.0
    %1227 = vmatpush1.msra.mxu0 0.0
    %1228 = vmatprep.mubr.f32.mxu0 0.0
    %1229 = vmatmul.mubr.f32.gmra.mrb[0].mxu0 %v1162
    %v1230 = vpop.f32.mrb[0].mxu0
    %v1231 = vadd.f32 0.0, %v1230
    %v1232 = vpop.f32.mrb[0].mxu0
    %1233 = vdwg.mxu0
    %v1234 = vrcp.pop %v1156
    %v1235 = vmul.f32 %v1231, %v1234
    %v1236 = vld [vmem:[#allocation13 + $0x10] sm:$0xff]
    %v1237 = vld [vmem:[#allocation13 + $0x18] sm:$0xff]
    %v1239 = vsel %vm392, %v1235, 0
    %1241 = vmatprep.subr.mxu0 0.0
    %1242 = vmatpush1.msra.mxu0 %v1236
    %1243 = vmatprep.subr.mxu0 0.0
    %1244 = vmatpush1.msra.mxu0 %v1237
    %1245 = vmatprep.subr.mxu0 0.0
    %1246 = vmatpush1.msra.mxu0 0.0
    %1247 = vmatprep.subr.mxu0 0.0
    %1248 = vmatpush1.msra.mxu0 0.0
    %1249 = vmatprep.subr.mxu0 0.0
    %1250 = vmatpush1.msra.mxu0 0.0
    %1251 = vmatprep.subr.mxu0 0.0
    %1252 = vmatpush1.msra.mxu0 0.0
    %1253 = vmatprep.subr.mxu0 0.0
    %1254 = vmatpush1.msra.mxu0 0.0
    %1255 = vmatprep.subr.mxu0 0.0
    %1256 = vmatpush1.msra.mxu0 0.0
    %1257 = vmatprep.subr.mxu0 0.0
    %1258 = vmatpush1.msra.mxu0 0.0
    %1259 = vmatprep.subr.mxu0 0.0
    %1260 = vmatpush1.msra.mxu0 0.0
    %1261 = vmatprep.subr.mxu0 0.0
    %1262 = vmatpush1.msra.mxu0 0.0
    %1263 = vmatprep.subr.mxu0 0.0
    %1264 = vmatpush1.msra.mxu0 0.0
    %1265 = vmatprep.subr.mxu0 0.0
    %1266 = vmatpush1.msra.mxu0 0.0
    %1267 = vmatprep.subr.mxu0 0.0
    %1268 = vmatpush1.msra.mxu0 0.0
    %1269 = vmatprep.subr.mxu0 0.0
    %1270 = vmatpush1.msra.mxu0 0.0
    %1271 = vmatprep.subr.mxu0 0.0
    %1272 = vmatpush1.msra.mxu0 0.0
    %1273 = vmatprep.subr.mxu0 0.0
    %1274 = vmatpush1.msra.mxu0 0.0
    %1275 = vmatprep.subr.mxu0 0.0
    %1276 = vmatpush1.msra.mxu0 0.0
    %1277 = vmatprep.subr.mxu0 0.0
    %1278 = vmatpush1.msra.mxu0 0.0
    %1279 = vmatprep.subr.mxu0 0.0
    %1280 = vmatpush1.msra.mxu0 0.0
    %1281 = vmatprep.subr.mxu0 0.0
    %1282 = vmatpush1.msra.mxu0 0.0
    %1283 = vmatprep.subr.mxu0 0.0
    %1284 = vmatpush1.msra.mxu0 0.0
    %1285 = vmatprep.subr.mxu0 0.0
    %1286 = vmatpush1.msra.mxu0 0.0
    %1287 = vmatprep.subr.mxu0 0.0
    %1288 = vmatpush1.msra.mxu0 0.0
    %1289 = vmatprep.subr.mxu0 0.0
    %1290 = vmatpush1.msra.mxu0 0.0
    %1291 = vmatprep.subr.mxu0 0.0
    %1292 = vmatpush1.msra.mxu0 0.0
    %1293 = vmatprep.subr.mxu0 0.0
    %1294 = vmatpush1.msra.mxu0 0.0
    %1295 = vmatprep.subr.mxu0 0.0
    %1296 = vmatpush1.msra.mxu0 0.0
    %1297 = vmatprep.subr.mxu0 0.0
    %1298 = vmatpush1.msra.mxu0 0.0
    %1299 = vmatprep.subr.mxu0 0.0
    %1300 = vmatpush1.msra.mxu0 0.0
    %1301 = vmatprep.subr.mxu0 0.0
    %1302 = vmatpush1.msra.mxu0 0.0
    %1303 = vmatprep.subr.mxu0 0.0
    %1304 = vmatpush1.msra.mxu0 0.0
    %1305 = vmatprep.mubr.f32.mxu0 0.0
    %1306 = vmatmul.mubr.f32.gmra.mrb[0].mxu0 %v1239
    %v1307 = vpop.f32.mrb[0].mxu0
    %v1308 = vadd.f32 0.0, %v1307
    %v1309 = vpop.f32.mrb[0].mxu0
    %1310 = vdwg.mxu0
    %v1312 = vsel %vm392, %v1067, 0
    %1314 = vmatprep.subr.mxu0 0.0
    %1315 = vmatpush1.msra.mxu0 %v1068
    %1316 = vmatprep.subr.mxu0 0.0
    %1317 = vmatpush1.msra.mxu0 %v1069
    %1318 = vmatprep.subr.mxu0 0.0
    %1319 = vmatpush1.msra.mxu0 0.0
    %1320 = vmatprep.subr.mxu0 0.0
    %1321 = vmatpush1.msra.mxu0 0.0
    %1322 = vmatprep.subr.mxu0 0.0
    %1323 = vmatpush1.msra.mxu0 0.0
    %1324 = vmatprep.subr.mxu0 0.0
    %1325 = vmatpush1.msra.mxu0 0.0
    %1326 = vmatprep.subr.mxu0 0.0
    %1327 = vmatpush1.msra.mxu0 0.0
    %1328 = vmatprep.subr.mxu0 0.0
    %1329 = vmatpush1.msra.mxu0 0.0
    %1330 = vmatprep.subr.mxu0 0.0
    %1331 = vmatpush1.msra.mxu0 0.0
    %1332 = vmatprep.subr.mxu0 0.0
    %1333 = vmatpush1.msra.mxu0 0.0
    %1334 = vmatprep.subr.mxu0 0.0
    %1335 = vmatpush1.msra.mxu0 0.0
    %1336 = vmatprep.subr.mxu0 0.0
    %1337 = vmatpush1.msra.mxu0 0.0
    %1338 = vmatprep.subr.mxu0 0.0
    %1339 = vmatpush1.msra.mxu0 0.0
    %1340 = vmatprep.subr.mxu0 0.0
    %1341 = vmatpush1.msra.mxu0 0.0
    %1342 = vmatprep.subr.mxu0 0.0
    %1343 = vmatpush1.msra.mxu0 0.0
    %1344 = vmatprep.subr.mxu0 0.0
    %1345 = vmatpush1.msra.mxu0 0.0
    %1346 = vmatprep.subr.mxu0 0.0
    %1347 = vmatpush1.msra.mxu0 0.0
    %1348 = vmatprep.subr.mxu0 0.0
    %1349 = vmatpush1.msra.mxu0 0.0
    %1350 = vmatprep.subr.mxu0 0.0
    %1351 = vmatpush1.msra.mxu0 0.0
    %1352 = vmatprep.subr.mxu0 0.0
    %1353 = vmatpush1.msra.mxu0 0.0
    %1354 = vmatprep.subr.mxu0 0.0
    %1355 = vmatpush1.msra.mxu0 0.0
    %1356 = vmatprep.subr.mxu0 0.0
    %1357 = vmatpush1.msra.mxu0 0.0
    %1358 = vmatprep.subr.mxu0 0.0
    %1359 = vmatpush1.msra.mxu0 0.0
    %1360 = vmatprep.subr.mxu0 0.0
    %1361 = vmatpush1.msra.mxu0 0.0
    %1362 = vmatprep.subr.mxu0 0.0
    %1363 = vmatpush1.msra.mxu0 0.0
    %1364 = vmatprep.subr.mxu0 0.0
    %1365 = vmatpush1.msra.mxu0 0.0
    %1366 = vmatprep.subr.mxu0 0.0
    %1367 = vmatpush1.msra.mxu0 0.0
    %1368 = vmatprep.subr.mxu0 0.0
    %1369 = vmatpush1.msra.mxu0 0.0
    %1370 = vmatprep.subr.mxu0 0.0
    %1371 = vmatpush1.msra.mxu0 0.0
    %1372 = vmatprep.subr.mxu0 0.0
    %1373 = vmatpush1.msra.mxu0 0.0
    %1374 = vmatprep.subr.mxu0 0.0
    %1375 = vmatpush1.msra.mxu0 0.0
    %1376 = vmatprep.subr.mxu0 0.0
    %1377 = vmatpush1.msra.mxu0 0.0
    %1378 = vmatprep.mubr.f32.mxu0 0.0
    %1379 = vmatmul.mubr.f32.gmra.mrb[0].mxu0 %v1312
    %v1380 = vpop.f32.mrb[0].mxu0
    %v1381 = vadd.f32 %v1308, %v1380
    %v1382 = vpop.f32.mrb[0].mxu0
    %1383 = vdwg.mxu0
    %v1384 = vadd.f32 %v1381, %v129
    %v1385 = vsel %vm138, %v1384, 0.0
    %1386 = vadd.xlane.f32.xlu0 %v1385
    %v1387 = vpop.xlane.xlu0 %1386
    %v1388 = vmul.f32 %v1387, %v874
    %v1389 = vsub.f32 %v1384, %v1388
    %v1390 = vmul.f32 %v1389, %v1389
    %v1391 = vsel %vm138, %v1390, 0.0
    %1392 = vadd.xlane.f32.xlu0 %v1391
    %v1393 = vpop.xlane.xlu0 %1392
    %v1394 = vmul.f32 %v1393, %v881
    %v1395 = vrsqrt.pop %v1394
    %v1396 = vmul.f32 %v1394, %v1395
    %vm1397 = vcmp.eq.f32.partialorder %v1394, inf
    %v1398 = vsel %vm1397, %v1394, %v1396
    %vm1399 = vcmp.eq.f32.partialorder %v1394, 0.0
    %v1400 = vand.u32 %v1394, 2147483648
    %v1401 = vsel %vm1399, %v1400, %v1398
    %v1402 = vadd.f32 %v1401, 1e-09
    %v1403 = vrcp.pop %v1402
    %v1404 = vmul.f32 %v896, %v1389
    %v1405 = vmul.f32 %v1404, %v1403
    %v1406 = vadd.f32 %v1405, %v904
    %1407 = vst.msk [vmem:[#allocation14 + $0x8] sm:$0xff] %vm138, %v1406
    // Predicated region
    $region66: #{tpu_custom_call.1} parent=1 // pred_check
      _
    $region67: #{tpu_custom_call.1} parent=1 // pred_check_branch
      %1409 = sbr.rel (0) target = $region69
    $region68: #{tpu_custom_call.1} parent=1 // pred_region
      %s1411 = ssub.s32 256, 256
      %1412 = vsyncadd [#allocation4], %s1411
      %s1413 = sshll.u32 [#allocation14], 4
      %s1414 = int_to_ptr.vmem [resolvable:$true] %s1413
      %1419 = dma.vmem_to_hbm [thread:$0]  %s1414, 256, %s9, [#allocation4], 128, 128, 8
    $region69: #{tpu_custom_call.1} parent=1 // pred_fallthru
      _
    // Predicated region
    $region70: #{tpu_custom_call.1} parent=1 // pred_check
      _
    $region71: #{tpu_custom_call.1} parent=1 // pred_check_branch
      %1421 = sbr.rel (0) target = $region73
    $region72: #{tpu_custom_call.1} parent=1 // pred_region
      %1422 = dma.done [#allocation4], 256
    $region73: #{tpu_custom_call.1} parent=1 // pred_fallthru
      _
    %1423 = vsyncpa [#allocation3], 1
    %1424 = vsyncpa [#allocation6], 1
    %1425 = vsyncpa [#allocation9], 1
    %1426 = vsyncpa [#allocation12], 1
    %1427 = vsyncpa [#allocation4], 1

</llo_original>
